<compile_context>
chip_gen: v5e
topology: v5e:2x2
jax: 0.10.0
libtpu: 0.0.40
codegen_flags: <defaults>
</compile_context>

<pallas_src>
import functools

import jax
import jax.numpy as jnp
from jax.experimental import pallas as pl
from jax.experimental.pallas import tpu as pltpu


# ----------------------------------------------------------------------------
# Fused Pallas kernel: all layers, all timesteps (grid over T).
# ----------------------------------------------------------------------------
def _gcn_lstm_seq_kernel(*refs, n_layers, in_dims, hidden_dims):
    """One grid step = one timestep of the full multi-layer GCN-LSTM.

    Layout: rows = B*V (batch x joints, sublane axis), channels on lanes.

    refs = [x_rows, adj_blk,
            (wx_j, wh_j, bias_j, h0_j, c0_j) for each layer j,   # inputs
            (h_j, c_j) for each layer j]                         # outputs
    The output refs have a constant block index -> they stay resident in VMEM
    across the whole grid and double as the recurrent state.
    """
    x_ref = refs[0]
    adj_ref = refs[1]
    layer_in = refs[2:2 + 5 * n_layers]
    layer_out = refs[2 + 5 * n_layers:2 + 7 * n_layers]

    t = pl.program_id(0)

    # Initialise the resident state from the provided initial hidden state.
    @pl.when(t == 0)
    def _():
        for j in range(n_layers):
            h0_ref, c0_ref = layer_in[5 * j + 3], layer_in[5 * j + 4]
            h_ref, c_ref = layer_out[2 * j], layer_out[2 * j + 1]
            h_ref[...] = h0_ref[...]
            c_ref[...] = c0_ref[...]

    adj = adj_ref[...]                      # (B*V, B*V) == kron(I_B, A^T)
    inp = x_ref[0]                          # (B*V, in_dims[0])

    for j in range(n_layers):
        wx_ref, wh_ref, b_ref = layer_in[5 * j], layer_in[5 * j + 1], layer_in[5 * j + 2]
        h_ref, c_ref = layer_out[2 * j], layer_out[2 * j + 1]
        hd = hidden_dims[j]

        # 1x1 conv (channel mixing) on the concatenated [x, h] input, done as
        # two MXU matmuls + bias; the 4*hd gate axis is lane-dense (128).
        z = (jnp.dot(inp, wx_ref[...], preferred_element_type=jnp.float32)
             + jnp.dot(h_ref[...], wh_ref[...], preferred_element_type=jnp.float32)
             + b_ref[...])
        # Graph aggregation over joints for the whole batch at once.
        z = jnp.dot(adj, z, preferred_element_type=jnp.float32)     # (B*V, 4hd)

        # Gates i, f, o, g: contiguous splits along the (lane) channel axis.
        ifo = jax.nn.sigmoid(z[:, :3 * hd])
        g = jnp.tanh(z[:, 3 * hd:])
        i = ifo[:, :hd]
        f = ifo[:, hd:2 * hd]
        o = ifo[:, 2 * hd:3 * hd]

        c_next = f * c_ref[...] + i * g
        h_next = o * jnp.tanh(c_next)

        c_ref[...] = c_next
        h_ref[...] = h_next
        inp = h_next                        # feeds the next layer


@functools.partial(jax.jit, static_argnames=("n_layers", "in_dims", "hidden_dims"))
def _gcn_lstm_run(x_rows, A, params, H0, C0, *, n_layers, in_dims, hidden_dims):
    """Run T timesteps of the full stack in a single pallas_call.

    x_rows: (T, B*V, Cin).  H0/C0: per-layer (B*V, hd) initial state.
    Returns per-layer final (H, C) in kernel layout.
    """
    T, BV, _ = x_rows.shape
    V = A.shape[0]
    B = BV // V

    # Block-diagonal adjacency for the whole batch (tiny; built under jit).
    adj_blk = jnp.kron(jnp.eye(B, dtype=jnp.float32), A.astype(jnp.float32).T)

    flat_inputs = [x_rows, adj_blk]
    in_specs = [
        pl.BlockSpec((1, BV, in_dims[0]), lambda t: (t, 0, 0)),
        pl.BlockSpec((BV, BV), lambda t: (0, 0)),
    ]
    for j in range(n_layers):
        w_x, w_h, bias = params[j]
        flat_inputs += [w_x, w_h, bias, H0[j], C0[j]]
        in_specs += [
            pl.BlockSpec(w_x.shape, lambda t: (0, 0)),
            pl.BlockSpec(w_h.shape, lambda t: (0, 0)),
            pl.BlockSpec(bias.shape, lambda t: (0, 0)),
            pl.BlockSpec((BV, hidden_dims[j]), lambda t: (0, 0)),
            pl.BlockSpec((BV, hidden_dims[j]), lambda t: (0, 0)),
        ]

    out_shape, out_specs = [], []
    for j in range(n_layers):
        out_shape += [jax.ShapeDtypeStruct((BV, hidden_dims[j]), jnp.float32)] * 2
        out_specs += [pl.BlockSpec((BV, hidden_dims[j]), lambda t: (0, 0))] * 2

    kernel = functools.partial(
        _gcn_lstm_seq_kernel, n_layers=n_layers, in_dims=in_dims,
        hidden_dims=hidden_dims)

    outs = pl.pallas_call(
        kernel,
        out_shape=tuple(out_shape),
        grid_spec=pltpu.PrefetchScalarGridSpec(
            num_scalar_prefetch=0,
            grid=(T,),
            in_specs=in_specs,
            out_specs=tuple(out_specs),
        ),
        compiler_params=pltpu.CompilerParams(
            dimension_semantics=("arbitrary",)),   # recurrence over time
    )(*flat_inputs)

    H_new = [outs[2 * j] for j in range(n_layers)]
    C_new = [outs[2 * j + 1] for j in range(n_layers)]
    return H_new, C_new


def _seq_to_rows(x_seq5):
    """(T, B, Cin, 1, V) -> (T, B*V, Cin)."""
    T, B, Cin, _, V = x_seq5.shape
    x = jnp.squeeze(x_seq5.astype(jnp.float32), axis=3)      # (T, B, Cin, V)
    return jnp.reshape(jnp.transpose(x, (0, 1, 3, 2)), (T, B * V, Cin))


def _rows_to_nchw(s, B, V):
    """(B*V, Ch) -> (B, Ch, 1, V)."""
    return jnp.transpose(jnp.reshape(s, (B, V, -1)), (0, 2, 1))[:, :, None, :]


# ----------------------------------------------------------------------------
# GCN_LSTM module wrapper (plain Python glue around the fused kernel).
# ----------------------------------------------------------------------------
class GCNLSTM:
    """JAX/Pallas port of the PyTorch GCN_LSTM module (forward pass only)."""

    def __init__(self, input_dim, hidden_dims, n_layers, A, key):
        self.input_dim = input_dim
        self.hidden_dims = list(hidden_dims)
        self.n_layers = n_layers
        self.num_joint = A.shape[1]
        self.A = jnp.asarray(A, jnp.float32)
        self.in_dims = [input_dim if i == 0 else hidden_dims[i - 1]
                        for i in range(n_layers)]

        self.params = []
        for i in range(n_layers):
            ch = self.hidden_dims[i]
            cin = self.in_dims[i]
            key, kx, kh, kb = jax.random.split(key, 4)
            # Conv2d(cin + ch, 4*ch, kernel=1) weight, stored transposed and
            # split by input (x vs h) so the gate axis is the lane axis.
            # TODO(synk): gate order (i, f, o, g) assumed to match the
            #             reference torch.split of the conv output channels.
            w_x = 0.1 * jax.random.normal(kx, (cin, 4 * ch), jnp.float32)
            w_h = 0.1 * jax.random.normal(kh, (ch, 4 * ch), jnp.float32)
            bias = 0.1 * jax.random.normal(kb, (1, 4 * ch), jnp.float32)
            self.params.append((w_x, w_h, bias))

        self._Hk, self._Ck = [], []    # kernel-layout state, (B*V, Ch_j)
        self.H, self.C = [], []        # NCHW views, (B, Ch_j, 1, V)
        self._batch = None

        self._run = functools.partial(
            _gcn_lstm_run, n_layers=n_layers, in_dims=tuple(self.in_dims),
            hidden_dims=tuple(self.hidden_dims))

    def init_hidden(self, batch_size):
        self._batch = batch_size
        self._Hk = [jnp.zeros((batch_size * self.num_joint, hd), jnp.float32)
                    for hd in self.hidden_dims]
        self._Ck = [jnp.zeros_like(h) for h in self._Hk]

    def _finish(self, H_new, C_new, B):
        self._Hk, self._Ck = list(H_new), list(C_new)
        V = self.num_joint
        self.H = [_rows_to_nchw(h, B, V) for h in H_new]
        self.C = [_rows_to_nchw(c, B, V) for c in C_new]
        return (self.H, self.C), self.H

    def forward(self, input_, first_timestep=False):
        """Per-timestep API matching the PyTorch module (T=1 kernel call)."""
        x = jnp.asarray(input_, jnp.float32)          # (B, Cin, 1, V)
        B = x.shape[0]
        if first_timestep:
            self.init_hidden(B)
        x_rows = _seq_to_rows(x[None])                # (1, B*V, Cin)
        H_new, C_new = self._run(x_rows, self.A, self.params,
                                 self._Hk, self._Ck)
        return self._finish(H_new, C_new, B)

    def forward_sequence(self, x_seq):
        """Run a whole (T, B, Cin, 1, V) clip in ONE fused kernel launch."""
        x_seq = jnp.asarray(x_seq, jnp.float32)
        B = x_seq.shape[1]
        self.init_hidden(B)
        x_rows = _seq_to_rows(x_seq)                  # (T, B*V, Cin)
        H_new, C_new = self._run(x_rows, self.A, self.params,
                                 self._Hk, self._Ck)
        return self._finish(H_new, C_new, B)


# ----------------------------------------------------------------------------
# Pure-JAX reference of the same (assumed) GCN-LSTM math, channel-major.
# ----------------------------------------------------------------------------
def _reference_forward(x_seq, A, params, hidden_dims, n_layers):
    B, _, _, V = x_seq[0].shape
    H = [jnp.zeros((B, hd, V), jnp.float32) for hd in hidden_dims]
    C = [jnp.zeros((B, hd, V), jnp.float32) for hd in hidden_dims]
    for x4 in x_seq:
        inp = jnp.squeeze(jnp.asarray(x4, jnp.float32), axis=2)   # (B, Cin, V)
        for j in range(n_layers):
            w_x, w_h, bias = params[j]
            hd = hidden_dims[j]
            z = (jnp.einsum('ko,bkv->bov', w_x, inp)
                 + jnp.einsum('ko,bkv->bov', w_h, H[j])
                 + bias[0][None, :, None])
            z = jnp.einsum('bov,vw->bow', z, A)
            i = jax.nn.sigmoid(z[:, 0 * hd:1 * hd])
            f = jax.nn.sigmoid(z[:, 1 * hd:2 * hd])
            o = jax.nn.sigmoid(z[:, 2 * hd:3 * hd])
            g = jnp.tanh(z[:, 3 * hd:4 * hd])
            C[j] = f * C[j] + i * g
            H[j] = o * jnp.tanh(C[j])
            inp = H[j]
    return ([h[:, :, None, :] for h in H], [c[:, :, None, :] for c in C])


if __name__ == "__main__":
    B = 2
    input_dim = 4
    hidden_dims = [32, 32]
    n_layers = 2
    V = 16   # num_joint
    T = 8    # timesteps in the demo sequence

    key = jax.random.PRNGKey(0)
    key, ka, kx, km = jax.random.split(key, 4)

    # Symmetric, row-normalized adjacency over V joints.
    A_raw = jax.random.uniform(ka, (V, V), dtype=jnp.float32)
    A_sym = (A_raw + A_raw.T) * 0.5 + jnp.eye(V, dtype=jnp.float32)
    A = A_sym / jnp.sum(A_sym, axis=1, keepdims=True)

    model = GCNLSTM(input_dim, hidden_dims, n_layers, A, km)

    x_seq = jax.random.normal(kx, (T, B, input_dim, 1, V), dtype=jnp.float32)

    # Fast path: the whole sequence in a single fused pallas_call.
    (H_seq, C_seq), H_out_seq = model.forward_sequence(x_seq)
    jax.block_until_ready(H_out_seq[-1])

    assert H_out_seq[0].shape == (B, hidden_dims[0], 1, V)
    assert C_seq[-1].shape == (B, hidden_dims[-1], 1, V)

    # Per-timestep API (same kernel, T=1 per call), matching the torch module.
    for t in range(T):
        (H_step, C_step), H_out_step = model.forward(x_seq[t],
                                                     first_timestep=(t == 0))
    jax.block_until_ready(H_out_step[-1])

    # Correctness check against the plain-JAX reference of the same math.
    H_ref, C_ref = _reference_forward(list(x_seq), A, model.params,
                                      hidden_dims, n_layers)
    for j in range(n_layers):
        assert jnp.allclose(H_out_seq[j], H_ref[j], atol=1e-3, rtol=1e-3), \
            f"H (sequence path) mismatch at layer {j}"
        assert jnp.allclose(C_seq[j], C_ref[j], atol=1e-3, rtol=1e-3), \
            f"C (sequence path) mismatch at layer {j}"
        assert jnp.allclose(H_out_step[j], H_ref[j], atol=1e-3, rtol=1e-3), \
            f"H (per-step path) mismatch at layer {j}"
        assert jnp.allclose(C_step[j], C_ref[j], atol=1e-3, rtol=1e-3), \
            f"C (per-step path) mismatch at layer {j}"

    print("KERNEL_OK")
</pallas_src>

<mosaic_0001>
module attributes {stable_mosaic.version = 11 : i64} {
  func.func @_gcn_lstm_seq_kernel(%arg0: i32, %arg1: memref<1x32x4xf32, #tpu.memory_space<vmem>>, %arg2: memref<32x32xf32, #tpu.memory_space<vmem>>, %arg3: memref<4x128xf32, #tpu.memory_space<vmem>>, %arg4: memref<32x128xf32, #tpu.memory_space<vmem>>, %arg5: memref<1x128xf32, #tpu.memory_space<vmem>>, %arg6: memref<32x32xf32, #tpu.memory_space<vmem>>, %arg7: memref<32x32xf32, #tpu.memory_space<vmem>>, %arg8: memref<32x128xf32, #tpu.memory_space<vmem>>, %arg9: memref<32x128xf32, #tpu.memory_space<vmem>>, %arg10: memref<1x128xf32, #tpu.memory_space<vmem>>, %arg11: memref<32x32xf32, #tpu.memory_space<vmem>>, %arg12: memref<32x32xf32, #tpu.memory_space<vmem>>, %arg13: memref<32x32xf32, #tpu.memory_space<vmem>>, %arg14: memref<32x32xf32, #tpu.memory_space<vmem>>, %arg15: memref<32x32xf32, #tpu.memory_space<vmem>>, %arg16: memref<32x32xf32, #tpu.memory_space<vmem>>) attributes {dimension_semantics = [#tpu.dimension_semantics<arbitrary>], iteration_bounds = array<i64: 8>, scalar_prefetch = 0 : i64, scratch_operands = 0 : i64, tpu.core_type = #tpu.core_type<tc>, window_params = [{transform_indices = @transform_0, window_bounds = array<i64: 1, 32, 4>}, {pipeline_mode = #tpu.pipeline_mode<synchronous>, transform_indices = @transform_1, window_bounds = array<i64: 32, 32>}, {pipeline_mode = #tpu.pipeline_mode<synchronous>, transform_indices = @transform_2, window_bounds = array<i64: 4, 128>}, {pipeline_mode = #tpu.pipeline_mode<synchronous>, transform_indices = @transform_3, window_bounds = array<i64: 32, 128>}, {pipeline_mode = #tpu.pipeline_mode<synchronous>, transform_indices = @transform_4, window_bounds = array<i64: 1, 128>}, {pipeline_mode = #tpu.pipeline_mode<synchronous>, transform_indices = @transform_5, window_bounds = array<i64: 32, 32>}, {pipeline_mode = #tpu.pipeline_mode<synchronous>, transform_indices = @transform_6, window_bounds = array<i64: 32, 32>}, {pipeline_mode = #tpu.pipeline_mode<synchronous>, transform_indices = @transform_7, window_bounds = array<i64: 32, 128>}, {pipeline_mode = #tpu.pipeline_mode<synchronous>, transform_indices = @transform_8, window_bounds = array<i64: 32, 128>}, {pipeline_mode = #tpu.pipeline_mode<synchronous>, transform_indices = @transform_9, window_bounds = array<i64: 1, 128>}, {pipeline_mode = #tpu.pipeline_mode<synchronous>, transform_indices = @transform_10, window_bounds = array<i64: 32, 32>}, {pipeline_mode = #tpu.pipeline_mode<synchronous>, transform_indices = @transform_11, window_bounds = array<i64: 32, 32>}, {pipeline_mode = #tpu.pipeline_mode<synchronous>, transform_indices = @transform_12, window_bounds = array<i64: 32, 32>}, {pipeline_mode = #tpu.pipeline_mode<synchronous>, transform_indices = @transform_13, window_bounds = array<i64: 32, 32>}, {pipeline_mode = #tpu.pipeline_mode<synchronous>, transform_indices = @transform_14, window_bounds = array<i64: 32, 32>}, {pipeline_mode = #tpu.pipeline_mode<synchronous>, transform_indices = @transform_15, window_bounds = array<i64: 32, 32>}]} {
    %c0_i32 = arith.constant 0 : i32
    %0 = arith.cmpi eq, %arg0, %c0_i32 : i32
    %1 = arith.extui %0 : i1 to i32
    %c0_i32_0 = arith.constant 0 : i32
    %2 = arith.cmpi ne, %1, %c0_i32_0 : i32
    scf.if %2 {
      %c0_40 = arith.constant 0 : index
      %c0_41 = arith.constant 0 : index
      %64 = vector.load %arg6[%c0_40, %c0_41] : memref<32x32xf32, #tpu.memory_space<vmem>>, vector<32x32xf32>
      %c0_42 = arith.constant 0 : index
      %c0_43 = arith.constant 0 : index
      %65 = vector.load %arg13[%c0_42, %c0_43] : memref<32x32xf32, #tpu.memory_space<vmem>>, vector<32x32xf32>
      tpu.vector_store %arg13[%c0_42, %c0_43], %64 {strides = array<i32>} : memref<32x32xf32, #tpu.memory_space<vmem>>, vector<32x32xf32>,
      %c0_44 = arith.constant 0 : index
      %c0_45 = arith.constant 0 : index
      %66 = vector.load %arg7[%c0_44, %c0_45] : memref<32x32xf32, #tpu.memory_space<vmem>>, vector<32x32xf32>
      %c0_46 = arith.constant 0 : index
      %c0_47 = arith.constant 0 : index
      %67 = vector.load %arg14[%c0_46, %c0_47] : memref<32x32xf32, #tpu.memory_space<vmem>>, vector<32x32xf32>
      tpu.vector_store %arg14[%c0_46, %c0_47], %66 {strides = array<i32>} : memref<32x32xf32, #tpu.memory_space<vmem>>, vector<32x32xf32>,
      %c0_48 = arith.constant 0 : index
      %c0_49 = arith.constant 0 : index
      %68 = vector.load %arg11[%c0_48, %c0_49] : memref<32x32xf32, #tpu.memory_space<vmem>>, vector<32x32xf32>
      %c0_50 = arith.constant 0 : index
      %c0_51 = arith.constant 0 : index
      %69 = vector.load %arg15[%c0_50, %c0_51] : memref<32x32xf32, #tpu.memory_space<vmem>>, vector<32x32xf32>
      tpu.vector_store %arg15[%c0_50, %c0_51], %68 {strides = array<i32>} : memref<32x32xf32, #tpu.memory_space<vmem>>, vector<32x32xf32>,
      %c0_52 = arith.constant 0 : index
      %c0_53 = arith.constant 0 : index
      %70 = vector.load %arg12[%c0_52, %c0_53] : memref<32x32xf32, #tpu.memory_space<vmem>>, vector<32x32xf32>
      %c0_54 = arith.constant 0 : index
      %c0_55 = arith.constant 0 : index
      %71 = vector.load %arg16[%c0_54, %c0_55] : memref<32x32xf32, #tpu.memory_space<vmem>>, vector<32x32xf32>
      tpu.vector_store %arg16[%c0_54, %c0_55], %70 {strides = array<i32>} : memref<32x32xf32, #tpu.memory_space<vmem>>, vector<32x32xf32>,
    } else {
    }
    %c0 = arith.constant 0 : index
    %c0_1 = arith.constant 0 : index
    %3 = vector.load %arg2[%c0, %c0_1] : memref<32x32xf32, #tpu.memory_space<vmem>>, vector<32x32xf32>
    %c0_2 = arith.constant 0 : index
    %c0_3 = arith.constant 0 : index
    %c0_4 = arith.constant 0 : index
    %4 = vector.load %arg1[%c0_2, %c0_3, %c0_4] : memref<1x32x4xf32, #tpu.memory_space<vmem>>, vector<1x32x4xf32>
    %5 = vector.shape_cast %4 : vector<1x32x4xf32> to vector<32x4xf32>
    %c0_5 = arith.constant 0 : index
    %c0_6 = arith.constant 0 : index
    %6 = vector.load %arg3[%c0_5, %c0_6] : memref<4x128xf32, #tpu.memory_space<vmem>>, vector<4x128xf32>
    %cst = arith.constant dense<0.000000e+00> : vector<32x128xf32>
    %7 = tpu.matmul %5, %6, %cst {dimension_numbers = #tpu.dot_dimension_numbers<[1], [0], [0], [1], [0, 0, 1, 1], [], []>} : vector<32x4xf32>, vector<4x128xf32>, vector<32x128xf32> -> vector<32x128xf32>
    %c0_7 = arith.constant 0 : index
    %c0_8 = arith.constant 0 : index
    %8 = vector.load %arg13[%c0_7, %c0_8] : memref<32x32xf32, #tpu.memory_space<vmem>>, vector<32x32xf32>
    %c0_9 = arith.constant 0 : index
    %c0_10 = arith.constant 0 : index
    %9 = vector.load %arg4[%c0_9, %c0_10] : memref<32x128xf32, #tpu.memory_space<vmem>>, vector<32x128xf32>
    %cst_11 = arith.constant dense<0.000000e+00> : vector<32x128xf32>
    %10 = tpu.matmul %8, %9, %cst_11 {dimension_numbers = #tpu.dot_dimension_numbers<[1], [0], [0], [1], [0, 0, 1, 1], [], []>} : vector<32x32xf32>, vector<32x128xf32>, vector<32x128xf32> -> vector<32x128xf32>
    %11 = arith.addf %7, %10 : vector<32x128xf32>
    %c0_12 = arith.constant 0 : index
    %c0_13 = arith.constant 0 : index
    %12 = vector.load %arg5[%c0_12, %c0_13] : memref<1x128xf32, #tpu.memory_space<vmem>>, vector<1x128xf32>
    %13 = vector.broadcast %12 : vector<1x128xf32> to vector<32x128xf32>
    %14 = arith.addf %11, %13 : vector<32x128xf32>
    %cst_14 = arith.constant dense<0.000000e+00> : vector<32x128xf32>
    %15 = tpu.matmul %3, %14, %cst_14 {dimension_numbers = #tpu.dot_dimension_numbers<[1], [0], [0], [1], [0, 0, 1, 1], [], []>} : vector<32x32xf32>, vector<32x128xf32>, vector<32x128xf32> -> vector<32x128xf32>
    %16 = vector.extract_strided_slice %15 {offsets = [0, 0], sizes = [32, 96], strides = [1, 1]} : vector<32x128xf32> to vector<32x96xf32>
    %17 = arith.negf %16 : vector<32x96xf32>
    %18 = math.exp %17 : vector<32x96xf32>
    %cst_15 = arith.constant 1.000000e+00 : f32
    %19 = vector.broadcast %cst_15 : f32 to vector<32x96xf32>
    %20 = arith.addf %19, %18 : vector<32x96xf32>
    %21 = arith.divf %19, %20 : vector<32x96xf32>
    %22 = vector.extract_strided_slice %15 {offsets = [0, 96], sizes = [32, 32], strides = [1, 1]} : vector<32x128xf32> to vector<32x32xf32>
    %23 = math.tanh %22 : vector<32x32xf32>
    %24 = vector.extract_strided_slice %21 {offsets = [0, 0], sizes = [32, 32], strides = [1, 1]} : vector<32x96xf32> to vector<32x32xf32>
    %25 = vector.extract_strided_slice %21 {offsets = [0, 32], sizes = [32, 32], strides = [1, 1]} : vector<32x96xf32> to vector<32x32xf32>
    %26 = vector.extract_strided_slice %21 {offsets = [0, 64], sizes = [32, 32], strides = [1, 1]} : vector<32x96xf32> to vector<32x32xf32>
    %c0_16 = arith.constant 0 : index
    %c0_17 = arith.constant 0 : index
    %27 = vector.load %arg14[%c0_16, %c0_17] : memref<32x32xf32, #tpu.memory_space<vmem>>, vector<32x32xf32>
    %28 = arith.mulf %25, %27 : vector<32x32xf32>
    %29 = arith.mulf %24, %23 : vector<32x32xf32>
    %30 = arith.addf %28, %29 : vector<32x32xf32>
    %31 = math.tanh %30 : vector<32x32xf32>
    %32 = arith.mulf %26, %31 : vector<32x32xf32>
    %c0_18 = arith.constant 0 : index
    %c0_19 = arith.constant 0 : index
    %33 = vector.load %arg14[%c0_18, %c0_19] : memref<32x32xf32, #tpu.memory_space<vmem>>, vector<32x32xf32>
    tpu.vector_store %arg14[%c0_18, %c0_19], %30 {strides = array<i32>} : memref<32x32xf32, #tpu.memory_space<vmem>>, vector<32x32xf32>,
    %c0_20 = arith.constant 0 : index
    %c0_21 = arith.constant 0 : index
    %34 = vector.load %arg13[%c0_20, %c0_21] : memref<32x32xf32, #tpu.memory_space<vmem>>, vector<32x32xf32>
    tpu.vector_store %arg13[%c0_20, %c0_21], %32 {strides = array<i32>} : memref<32x32xf32, #tpu.memory_space<vmem>>, vector<32x32xf32>,
    %c0_22 = arith.constant 0 : index
    %c0_23 = arith.constant 0 : index
    %35 = vector.load %arg8[%c0_22, %c0_23] : memref<32x128xf32, #tpu.memory_space<vmem>>, vector<32x128xf32>
    %cst_24 = arith.constant dense<0.000000e+00> : vector<32x128xf32>
    %36 = tpu.matmul %32, %35, %cst_24 {dimension_numbers = #tpu.dot_dimension_numbers<[1], [0], [0], [1], [0, 0, 1, 1], [], []>} : vector<32x32xf32>, vector<32x128xf32>, vector<32x128xf32> -> vector<32x128xf32>
    %c0_25 = arith.constant 0 : index
    %c0_26 = arith.constant 0 : index
    %37 = vector.load %arg15[%c0_25, %c0_26] : memref<32x32xf32, #tpu.memory_space<vmem>>, vector<32x32xf32>
    %c0_27 = arith.constant 0 : index
    %c0_28 = arith.constant 0 : index
    %38 = vector.load %arg9[%c0_27, %c0_28] : memref<32x128xf32, #tpu.memory_space<vmem>>, vector<32x128xf32>
    %cst_29 = arith.constant dense<0.000000e+00> : vector<32x128xf32>
    %39 = tpu.matmul %37, %38, %cst_29 {dimension_numbers = #tpu.dot_dimension_numbers<[1], [0], [0], [1], [0, 0, 1, 1], [], []>} : vector<32x32xf32>, vector<32x128xf32>, vector<32x128xf32> -> vector<32x128xf32>
    %40 = arith.addf %36, %39 : vector<32x128xf32>
    %c0_30 = arith.constant 0 : index
    %c0_31 = arith.constant 0 : index
    %41 = vector.load %arg10[%c0_30, %c0_31] : memref<1x128xf32, #tpu.memory_space<vmem>>, vector<1x128xf32>
    %42 = vector.broadcast %41 : vector<1x128xf32> to vector<32x128xf32>
    %43 = arith.addf %40, %42 : vector<32x128xf32>
    %cst_32 = arith.constant dense<0.000000e+00> : vector<32x128xf32>
    %44 = tpu.matmul %3, %43, %cst_32 {dimension_numbers = #tpu.dot_dimension_numbers<[1], [0], [0], [1], [0, 0, 1, 1], [], []>} : vector<32x32xf32>, vector<32x128xf32>, vector<32x128xf32> -> vector<32x128xf32>
    %45 = vector.extract_strided_slice %44 {offsets = [0, 0], sizes = [32, 96], strides = [1, 1]} : vector<32x128xf32> to vector<32x96xf32>
    %46 = arith.negf %45 : vector<32x96xf32>
    %47 = math.exp %46 : vector<32x96xf32>
    %cst_33 = arith.constant 1.000000e+00 : f32
    %48 = vector.broadcast %cst_33 : f32 to vector<32x96xf32>
    %49 = arith.addf %48, %47 : vector<32x96xf32>
    %50 = arith.divf %48, %49 : vector<32x96xf32>
    %51 = vector.extract_strided_slice %44 {offsets = [0, 96], sizes = [32, 32], strides = [1, 1]} : vector<32x128xf32> to vector<32x32xf32>
    %52 = math.tanh %51 : vector<32x32xf32>
    %53 = vector.extract_strided_slice %50 {offsets = [0, 0], sizes = [32, 32], strides = [1, 1]} : vector<32x96xf32> to vector<32x32xf32>
    %54 = vector.extract_strided_slice %50 {offsets = [0, 32], sizes = [32, 32], strides = [1, 1]} : vector<32x96xf32> to vector<32x32xf32>
    %55 = vector.extract_strided_slice %50 {offsets = [0, 64], sizes = [32, 32], strides = [1, 1]} : vector<32x96xf32> to vector<32x32xf32>
    %c0_34 = arith.constant 0 : index
    %c0_35 = arith.constant 0 : index
    %56 = vector.load %arg16[%c0_34, %c0_35] : memref<32x32xf32, #tpu.memory_space<vmem>>, vector<32x32xf32>
    %57 = arith.mulf %54, %56 : vector<32x32xf32>
    %58 = arith.mulf %53, %52 : vector<32x32xf32>
    %59 = arith.addf %57, %58 : vector<32x32xf32>
    %60 = math.tanh %59 : vector<32x32xf32>
    %61 = arith.mulf %55, %60 : vector<32x32xf32>
    %c0_36 = arith.constant 0 : index
    %c0_37 = arith.constant 0 : index
    %62 = vector.load %arg16[%c0_36, %c0_37] : memref<32x32xf32, #tpu.memory_space<vmem>>, vector<32x32xf32>
    tpu.vector_store %arg16[%c0_36, %c0_37], %59 {strides = array<i32>} : memref<32x32xf32, #tpu.memory_space<vmem>>, vector<32x32xf32>,
    %c0_38 = arith.constant 0 : index
    %c0_39 = arith.constant 0 : index
    %63 = vector.load %arg15[%c0_38, %c0_39] : memref<32x32xf32, #tpu.memory_space<vmem>>, vector<32x32xf32>
    tpu.vector_store %arg15[%c0_38, %c0_39], %61 {strides = array<i32>} : memref<32x32xf32, #tpu.memory_space<vmem>>, vector<32x32xf32>,
    return
  }
  func.func @transform_0(%arg0: i32) -> (i32, i32, i32) {
    %c0_i32 = arith.constant 0 : i32
    %c0_i32_0 = arith.constant 0 : i32
    %c0_i32_1 = arith.constant 0 : i32
    return %arg0, %c0_i32, %c0_i32_0 : i32, i32, i32
  }
  func.func @transform_1(%arg0: i32) -> (i32, i32) {
    %c0_i32 = arith.constant 0 : i32
    %c0_i32_0 = arith.constant 0 : i32
    %c0_i32_1 = arith.constant 0 : i32
    return %c0_i32, %c0_i32_0 : i32, i32
  }
  func.func @transform_2(%arg0: i32) -> (i32, i32) {
    %c0_i32 = arith.constant 0 : i32
    %c0_i32_0 = arith.constant 0 : i32
    %c0_i32_1 = arith.constant 0 : i32
    return %c0_i32, %c0_i32_0 : i32, i32
  }
  func.func @transform_3(%arg0: i32) -> (i32, i32) {
    %c0_i32 = arith.constant 0 : i32
    %c0_i32_0 = arith.constant 0 : i32
    %c0_i32_1 = arith.constant 0 : i32
    return %c0_i32, %c0_i32_0 : i32, i32
  }
  func.func @transform_4(%arg0: i32) -> (i32, i32) {
    %c0_i32 = arith.constant 0 : i32
    %c0_i32_0 = arith.constant 0 : i32
    %c0_i32_1 = arith.constant 0 : i32
    return %c0_i32, %c0_i32_0 : i32, i32
  }
  func.func @transform_5(%arg0: i32) -> (i32, i32) {
    %c0_i32 = arith.constant 0 : i32
    %c0_i32_0 = arith.constant 0 : i32
    %c0_i32_1 = arith.constant 0 : i32
    return %c0_i32, %c0_i32_0 : i32, i32
  }
  func.func @transform_6(%arg0: i32) -> (i32, i32) {
    %c0_i32 = arith.constant 0 : i32
    %c0_i32_0 = arith.constant 0 : i32
    %c0_i32_1 = arith.constant 0 : i32
    return %c0_i32, %c0_i32_0 : i32, i32
  }
  func.func @transform_7(%arg0: i32) -> (i32, i32) {
    %c0_i32 = arith.constant 0 : i32
    %c0_i32_0 = arith.constant 0 : i32
    %c0_i32_1 = arith.constant 0 : i32
    return %c0_i32, %c0_i32_0 : i32, i32
  }
  func.func @transform_8(%arg0: i32) -> (i32, i32) {
    %c0_i32 = arith.constant 0 : i32
    %c0_i32_0 = arith.constant 0 : i32
    %c0_i32_1 = arith.constant 0 : i32
    return %c0_i32, %c0_i32_0 : i32, i32
  }
  func.func @transform_9(%arg0: i32) -> (i32, i32) {
    %c0_i32 = arith.constant 0 : i32
    %c0_i32_0 = arith.constant 0 : i32
    %c0_i32_1 = arith.constant 0 : i32
    return %c0_i32, %c0_i32_0 : i32, i32
  }
  func.func @transform_10(%arg0: i32) -> (i32, i32) {
    %c0_i32 = arith.constant 0 : i32
    %c0_i32_0 = arith.constant 0 : i32
    %c0_i32_1 = arith.constant 0 : i32
    return %c0_i32, %c0_i32_0 : i32, i32
  }
  func.func @transform_11(%arg0: i32) -> (i32, i32) {
    %c0_i32 = arith.constant 0 : i32
    %c0_i32_0 = arith.constant 0 : i32
    %c0_i32_1 = arith.constant 0 : i32
    return %c0_i32, %c0_i32_0 : i32, i32
  }
  func.func @transform_12(%arg0: i32) -> (i32, i32) {
    %c0_i32 = arith.constant 0 : i32
    %c0_i32_0 = arith.constant 0 : i32
    %c0_i32_1 = arith.constant 0 : i32
    return %c0_i32, %c0_i32_0 : i32, i32
  }
  func.func @transform_13(%arg0: i32) -> (i32, i32) {
    %c0_i32 = arith.constant 0 : i32
    %c0_i32_0 = arith.constant 0 : i32
    %c0_i32_1 = arith.constant 0 : i32
    return %c0_i32, %c0_i32_0 : i32, i32
  }
  func.func @transform_14(%arg0: i32) -> (i32, i32) {
    %c0_i32 = arith.constant 0 : i32
    %c0_i32_0 = arith.constant 0 : i32
    %c0_i32_1 = arith.constant 0 : i32
    return %c0_i32, %c0_i32_0 : i32, i32
  }
  func.func @transform_15(%arg0: i32) -> (i32, i32) {
    %c0_i32 = arith.constant 0 : i32
    %c0_i32_0 = arith.constant 0 : i32
    %c0_i32_1 = arith.constant 0 : i32
    return %c0_i32, %c0_i32_0 : i32, i32
  }
}

</mosaic_0001>

<llo_original>
// kernel: _gcn_lstm_run.1
$region0: #{_gcn_lstm_run.1}
  #allocation0 [shape = 'u32[]', space=smem, size = 0x4, offset = 0x4, fixed_abs, tag = 'smem constant byte address 0x4 - core index']
  #allocation1 [shape = 'u32[72,128]{1,0:T(1,128)}', space=vmem, size = 0x9000, scoped, tag = 'internal scratch']
  %s0 = inlined_call_operand.vmem [shape: f32[8,32,4], index: 0, kind: input, shape index: {}]
  %s1 = inlined_call_operand.vmem [shape: f32[32,32], index: 1, kind: input, shape index: {}]
  %s2 = inlined_call_operand.vmem [shape: f32[4,128], index: 2, kind: input, shape index: {}]
  %s3 = inlined_call_operand.vmem [shape: f32[32,128], index: 3, kind: input, shape index: {}]
  %s4 = inlined_call_operand.vmem [shape: f32[1,128], index: 4, kind: input, shape index: {}]
  %s5 = inlined_call_operand.vmem [shape: f32[32,32], index: 5, kind: input, shape index: {}]
  %s6 = inlined_call_operand.vmem [shape: f32[32,32], index: 6, kind: input, shape index: {}]
  %s7 = inlined_call_operand.vmem [shape: f32[32,128], index: 7, kind: input, shape index: {}]
  %s8 = inlined_call_operand.vmem [shape: f32[32,128], index: 8, kind: input, shape index: {}]
  %s9 = inlined_call_operand.vmem [shape: f32[1,128], index: 9, kind: input, shape index: {}]
  %s10 = inlined_call_operand.vmem [shape: f32[32,32], index: 10, kind: input, shape index: {}]
  %s11 = inlined_call_operand.vmem [shape: f32[32,32], index: 11, kind: input, shape index: {}]
  %s12 = inlined_call_operand.hbm [shape: f32[32,32], index: 12, kind: output, shape index: {0}]
  %s13 = inlined_call_operand.hbm [shape: f32[32,32], index: 13, kind: output, shape index: {1}]
  %s14 = inlined_call_operand.hbm [shape: f32[32,32], index: 14, kind: output, shape index: {2}]
  %s15 = inlined_call_operand.hbm [shape: f32[32,32], index: 15, kind: output, shape index: {3}]
  %16 = xla_tuple %s12, %s13, %s14, %s15
  %s17 = sld [smem:[#allocation0]]
  $region109: #{_gcn_lstm_run.1} parent=0
    _
  %s19 = ssub.s32 1, %s17
  %s20 = scalar_select 0, %s19, %s17
  $region1: #{_gcn_lstm_run.1} parent=0
    #allocation2 [shape = 'u8[16384]{0}', space=vmem, size = 0x4000, scoped, tag = 'output window, operand 0, single buffered']
    #allocation3 [shape = 's32[2]{0}', space=sflag, size = 0x8, scoped, tag = 'scoped memory for _gcn_lstm_run.1']
    #allocation4 [shape = 'u8[16384]{0}', space=vmem, size = 0x4000, scoped, tag = 'output window, operand 1, single buffered']
    #allocation5 [shape = 's32[1]{0}', space=sflag, size = 0x4, scoped, tag = 'scoped memory for _gcn_lstm_run.1']
    #allocation6 [shape = 'u8[16384]{0}', space=vmem, size = 0x4000, scoped, tag = 'output window, operand 2, single buffered']
    #allocation7 [shape = 'u8[16384]{0}', space=vmem, size = 0x4000, scoped, tag = 'output window, operand 3, single buffered']
    #allocation8 [shape = 's32[1]{0}', space=sflag, size = 0x4, scoped, tag = 'scoped memory for _gcn_lstm_run.1']
    %21 = vsyncpa [#allocation3], 0
    %22 = vsyncpa [#allocation5], 0
    %23 = vsyncpa [#allocation8], 0
    loop: start=0, step=1, limit=10
    $region2: #{_gcn_lstm_run.1} parent=1 // loop_pre_header
      _
    $region3: #{_gcn_lstm_run.1} parent=1 // loop_header
      %s25 = sphi 0, %s29
      %p26 = scmp.ge.s32.totalorder %s25, 10
      %s35 = sphi 0, %s37
      %s38 = sphi 0, %s35
      %s39 = sphi 0, %s38
      %s55 = sphi 0, %s39
      %s59 = sphi 0, %s59
      %s61 = sphi 0, %s59
      %s62 = sphi 0, %s61
      %s76 = sphi 0, %s62
      %s80 = sphi 0, %s80
      %s82 = sphi 0, %s80
      %s83 = sphi 0, %s82
      %s97 = sphi 0, %s83
      %s101 = sphi 0, %s101
      %s103 = sphi 0, %s101
      %s104 = sphi 0, %s103
      %s118 = sphi 0, %s104
      %s122 = sphi 0, %s122
      %s124 = sphi 0, %s122
      %s125 = sphi 0, %s124
      %s139 = sphi 0, %s125
      %s143 = sphi 0, %s143
      %s145 = sphi 0, %s143
      %s146 = sphi 0, %s145
      %s160 = sphi 0, %s146
      %s164 = sphi 0, %s164
      %s166 = sphi 0, %s164
      %s167 = sphi 0, %s166
      %s181 = sphi 0, %s167
      %s185 = sphi 0, %s185
      %s187 = sphi 0, %s185
      %s188 = sphi 0, %s187
      %s202 = sphi 0, %s188
      %s206 = sphi 0, %s206
      %s208 = sphi 0, %s206
      %s209 = sphi 0, %s208
      %s223 = sphi 0, %s209
      %s227 = sphi 0, %s227
      %s229 = sphi 0, %s227
      %s230 = sphi 0, %s229
      %s244 = sphi 0, %s230
      %s248 = sphi 0, %s248
      %s250 = sphi 0, %s248
      %s251 = sphi 0, %s250
      %s265 = sphi 0, %s251
      %s269 = sphi 0, %s269
      %s271 = sphi 0, %s269
      %s272 = sphi 0, %s271
      %s286 = sphi 0, %s272
      %s290 = sphi 0, %s290
      %s292 = sphi 0, %s290
      %s293 = sphi 0, %s292
      %s307 = sphi 0, %s293
      %s311 = sphi 0, %s311
      %s313 = sphi 0, %s311
      %s314 = sphi 0, %s313
      %s328 = sphi 0, %s314
      %s332 = sphi 0, %s332
      %s334 = sphi 0, %s332
      %s335 = sphi 0, %s334
      %s349 = sphi 0, %s335
      %s353 = sphi 0, %s353
      %s355 = sphi 0, %s353
      %s356 = sphi 0, %s355
      %s370 = sphi 0, %s356
    $region4: #{_gcn_lstm_run.1} parent=1 // loop_header_branch
      %28 = sbr.rel (%p26) target = $region8
    $region5: #{_gcn_lstm_run.1} parent=1 // loop_body
      %s30 = ssub.s32 %s25, 1
      %s31 = ssub.s32 %s25, 2
      %s32 = sadd.s32 %s25, 1
      %s33 = ssub.s32 %s25, %s32
      %p34 = scmp.eq.s32.totalorder %s33, 0
      %s36 = sadd.s32 %s35, 1
      %s37 = scalar_select %p34, %s35, %s36
      %p40 = pneg %p34
      %p41 = scmp.eq.s32.totalorder %s25, 7
      %p42 = por %p40, %p41
      %p43 = scmp.ne.s32.totalorder %s35, %s38
      %p44 = scmp.eq.s32.totalorder %s25, 0
      %p45 = por %p43, %p44
      %p46 = scmp.ne.s32.totalorder %s35, %s38
      %p47 = scmp.eq.s32.totalorder %s30, 7
      %p48 = por %p46, %p47
      %p49 = scmp.ne.s32.totalorder %s38, %s39
      %p50 = scmp.eq.s32.totalorder %s30, 0
      %p51 = por %p49, %p50
      %p52 = scmp.ne.s32.totalorder %s38, %s39
      %p53 = scmp.eq.s32.totalorder %s31, 7
      %p54 = por %p52, %p53
      %p56 = scmp.ne.s32.totalorder %s39, %s55
      %p57 = scmp.eq.s32.totalorder %s31, 0
      %p58 = por %p56, %p57
      %s60 = sadd.s32 %s59, 1
      %p63 = scmp.eq.s32.totalorder %s25, 7
      %p64 = scmp.ne.s32.totalorder %s59, %s61
      %p65 = scmp.eq.s32.totalorder %s25, 0
      %p66 = por %p64, %p65
      %p67 = scmp.ne.s32.totalorder %s59, %s61
      %p68 = scmp.eq.s32.totalorder %s30, 7
      %p69 = por %p67, %p68
      %p70 = scmp.ne.s32.totalorder %s61, %s62
      %p71 = scmp.eq.s32.totalorder %s30, 0
      %p72 = por %p70, %p71
      %p73 = scmp.ne.s32.totalorder %s61, %s62
      %p74 = scmp.eq.s32.totalorder %s31, 7
      %p75 = por %p73, %p74
      %p77 = scmp.ne.s32.totalorder %s62, %s76
      %p78 = scmp.eq.s32.totalorder %s31, 0
      %p79 = por %p77, %p78
      %s81 = sadd.s32 %s80, 1
      %p84 = scmp.eq.s32.totalorder %s25, 7
      %p85 = scmp.ne.s32.totalorder %s80, %s82
      %p86 = scmp.eq.s32.totalorder %s25, 0
      %p87 = por %p85, %p86
      %p88 = scmp.ne.s32.totalorder %s80, %s82
      %p89 = scmp.eq.s32.totalorder %s30, 7
      %p90 = por %p88, %p89
      %p91 = scmp.ne.s32.totalorder %s82, %s83
      %p92 = scmp.eq.s32.totalorder %s30, 0
      %p93 = por %p91, %p92
      %p94 = scmp.ne.s32.totalorder %s82, %s83
      %p95 = scmp.eq.s32.totalorder %s31, 7
      %p96 = por %p94, %p95
      %p98 = scmp.ne.s32.totalorder %s83, %s97
      %p99 = scmp.eq.s32.totalorder %s31, 0
      %p100 = por %p98, %p99
      %s102 = sadd.s32 %s101, 1
      %p105 = scmp.eq.s32.totalorder %s25, 7
      %p106 = scmp.ne.s32.totalorder %s101, %s103
      %p107 = scmp.eq.s32.totalorder %s25, 0
      %p108 = por %p106, %p107
      %p109 = scmp.ne.s32.totalorder %s101, %s103
      %p110 = scmp.eq.s32.totalorder %s30, 7
      %p111 = por %p109, %p110
      %p112 = scmp.ne.s32.totalorder %s103, %s104
      %p113 = scmp.eq.s32.totalorder %s30, 0
      %p114 = por %p112, %p113
      %p115 = scmp.ne.s32.totalorder %s103, %s104
      %p116 = scmp.eq.s32.totalorder %s31, 7
      %p117 = por %p115, %p116
      %p119 = scmp.ne.s32.totalorder %s104, %s118
      %p120 = scmp.eq.s32.totalorder %s31, 0
      %p121 = por %p119, %p120
      %s123 = sadd.s32 %s122, 1
      %p126 = scmp.eq.s32.totalorder %s25, 7
      %p127 = scmp.ne.s32.totalorder %s122, %s124
      %p128 = scmp.eq.s32.totalorder %s25, 0
      %p129 = por %p127, %p128
      %p130 = scmp.ne.s32.totalorder %s122, %s124
      %p131 = scmp.eq.s32.totalorder %s30, 7
      %p132 = por %p130, %p131
      %p133 = scmp.ne.s32.totalorder %s124, %s125
      %p134 = scmp.eq.s32.totalorder %s30, 0
      %p135 = por %p133, %p134
      %p136 = scmp.ne.s32.totalorder %s124, %s125
      %p137 = scmp.eq.s32.totalorder %s31, 7
      %p138 = por %p136, %p137
      %p140 = scmp.ne.s32.totalorder %s125, %s139
      %p141 = scmp.eq.s32.totalorder %s31, 0
      %p142 = por %p140, %p141
      %s144 = sadd.s32 %s143, 1
      %p147 = scmp.eq.s32.totalorder %s25, 7
      %p148 = scmp.ne.s32.totalorder %s143, %s145
      %p149 = scmp.eq.s32.totalorder %s25, 0
      %p150 = por %p148, %p149
      %p151 = scmp.ne.s32.totalorder %s143, %s145
      %p152 = scmp.eq.s32.totalorder %s30, 7
      %p153 = por %p151, %p152
      %p154 = scmp.ne.s32.totalorder %s145, %s146
      %p155 = scmp.eq.s32.totalorder %s30, 0
      %p156 = por %p154, %p155
      %p157 = scmp.ne.s32.totalorder %s145, %s146
      %p158 = scmp.eq.s32.totalorder %s31, 7
      %p159 = por %p157, %p158
      %p161 = scmp.ne.s32.totalorder %s146, %s160
      %p162 = scmp.eq.s32.totalorder %s31, 0
      %p163 = por %p161, %p162
      %s165 = sadd.s32 %s164, 1
      %p168 = scmp.eq.s32.totalorder %s25, 7
      %p169 = scmp.ne.s32.totalorder %s164, %s166
      %p170 = scmp.eq.s32.totalorder %s25, 0
      %p171 = por %p169, %p170
      %p172 = scmp.ne.s32.totalorder %s164, %s166
      %p173 = scmp.eq.s32.totalorder %s30, 7
      %p174 = por %p172, %p173
      %p175 = scmp.ne.s32.totalorder %s166, %s167
      %p176 = scmp.eq.s32.totalorder %s30, 0
      %p177 = por %p175, %p176
      %p178 = scmp.ne.s32.totalorder %s166, %s167
      %p179 = scmp.eq.s32.totalorder %s31, 7
      %p180 = por %p178, %p179
      %p182 = scmp.ne.s32.totalorder %s167, %s181
      %p183 = scmp.eq.s32.totalorder %s31, 0
      %p184 = por %p182, %p183
      %s186 = sadd.s32 %s185, 1
      %p189 = scmp.eq.s32.totalorder %s25, 7
      %p190 = scmp.ne.s32.totalorder %s185, %s187
      %p191 = scmp.eq.s32.totalorder %s25, 0
      %p192 = por %p190, %p191
      %p193 = scmp.ne.s32.totalorder %s185, %s187
      %p194 = scmp.eq.s32.totalorder %s30, 7
      %p195 = por %p193, %p194
      %p196 = scmp.ne.s32.totalorder %s187, %s188
      %p197 = scmp.eq.s32.totalorder %s30, 0
      %p198 = por %p196, %p197
      %p199 = scmp.ne.s32.totalorder %s187, %s188
      %p200 = scmp.eq.s32.totalorder %s31, 7
      %p201 = por %p199, %p200
      %p203 = scmp.ne.s32.totalorder %s188, %s202
      %p204 = scmp.eq.s32.totalorder %s31, 0
      %p205 = por %p203, %p204
      %s207 = sadd.s32 %s206, 1
      %p210 = scmp.eq.s32.totalorder %s25, 7
      %p211 = scmp.ne.s32.totalorder %s206, %s208
      %p212 = scmp.eq.s32.totalorder %s25, 0
      %p213 = por %p211, %p212
      %p214 = scmp.ne.s32.totalorder %s206, %s208
      %p215 = scmp.eq.s32.totalorder %s30, 7
      %p216 = por %p214, %p215
      %p217 = scmp.ne.s32.totalorder %s208, %s209
      %p218 = scmp.eq.s32.totalorder %s30, 0
      %p219 = por %p217, %p218
      %p220 = scmp.ne.s32.totalorder %s208, %s209
      %p221 = scmp.eq.s32.totalorder %s31, 7
      %p222 = por %p220, %p221
      %p224 = scmp.ne.s32.totalorder %s209, %s223
      %p225 = scmp.eq.s32.totalorder %s31, 0
      %p226 = por %p224, %p225
      %s228 = sadd.s32 %s227, 1
      %p231 = scmp.eq.s32.totalorder %s25, 7
      %p232 = scmp.ne.s32.totalorder %s227, %s229
      %p233 = scmp.eq.s32.totalorder %s25, 0
      %p234 = por %p232, %p233
      %p235 = scmp.ne.s32.totalorder %s227, %s229
      %p236 = scmp.eq.s32.totalorder %s30, 7
      %p237 = por %p235, %p236
      %p238 = scmp.ne.s32.totalorder %s229, %s230
      %p239 = scmp.eq.s32.totalorder %s30, 0
      %p240 = por %p238, %p239
      %p241 = scmp.ne.s32.totalorder %s229, %s230
      %p242 = scmp.eq.s32.totalorder %s31, 7
      %p243 = por %p241, %p242
      %p245 = scmp.ne.s32.totalorder %s230, %s244
      %p246 = scmp.eq.s32.totalorder %s31, 0
      %p247 = por %p245, %p246
      %s249 = sadd.s32 %s248, 1
      %p252 = scmp.eq.s32.totalorder %s25, 7
      %p253 = scmp.ne.s32.totalorder %s248, %s250
      %p254 = scmp.eq.s32.totalorder %s25, 0
      %p255 = por %p253, %p254
      %p256 = scmp.ne.s32.totalorder %s248, %s250
      %p257 = scmp.eq.s32.totalorder %s30, 7
      %p258 = por %p256, %p257
      %p259 = scmp.ne.s32.totalorder %s250, %s251
      %p260 = scmp.eq.s32.totalorder %s30, 0
      %p261 = por %p259, %p260
      %p262 = scmp.ne.s32.totalorder %s250, %s251
      %p263 = scmp.eq.s32.totalorder %s31, 7
      %p264 = por %p262, %p263
      %p266 = scmp.ne.s32.totalorder %s251, %s265
      %p267 = scmp.eq.s32.totalorder %s31, 0
      %p268 = por %p266, %p267
      %s270 = sadd.s32 %s269, 1
      %p273 = scmp.eq.s32.totalorder %s25, 7
      %p274 = scmp.ne.s32.totalorder %s269, %s271
      %p275 = scmp.eq.s32.totalorder %s25, 0
      %p276 = por %p274, %p275
      %p277 = scmp.ne.s32.totalorder %s269, %s271
      %p278 = scmp.eq.s32.totalorder %s30, 7
      %p279 = por %p277, %p278
      %p280 = scmp.ne.s32.totalorder %s271, %s272
      %p281 = scmp.eq.s32.totalorder %s30, 0
      %p282 = por %p280, %p281
      %p283 = scmp.ne.s32.totalorder %s271, %s272
      %p284 = scmp.eq.s32.totalorder %s31, 7
      %p285 = por %p283, %p284
      %p287 = scmp.ne.s32.totalorder %s272, %s286
      %p288 = scmp.eq.s32.totalorder %s31, 0
      %p289 = por %p287, %p288
      %s291 = sadd.s32 %s290, 1
      %p294 = scmp.eq.s32.totalorder %s25, 7
      %p295 = scmp.ne.s32.totalorder %s290, %s292
      %p296 = scmp.eq.s32.totalorder %s25, 0
      %p297 = por %p295, %p296
      %p298 = scmp.ne.s32.totalorder %s290, %s292
      %p299 = scmp.eq.s32.totalorder %s30, 7
      %p300 = por %p298, %p299
      %p301 = scmp.ne.s32.totalorder %s292, %s293
      %p302 = scmp.eq.s32.totalorder %s30, 0
      %p303 = por %p301, %p302
      %p304 = scmp.ne.s32.totalorder %s292, %s293
      %p305 = scmp.eq.s32.totalorder %s31, 7
      %p306 = por %p304, %p305
      %p308 = scmp.ne.s32.totalorder %s293, %s307
      %p309 = scmp.eq.s32.totalorder %s31, 0
      %p310 = por %p308, %p309
      %s312 = sadd.s32 %s311, 1
      %p315 = scmp.eq.s32.totalorder %s25, 7
      %p316 = scmp.ne.s32.totalorder %s311, %s313
      %p317 = scmp.eq.s32.totalorder %s25, 0
      %p318 = por %p316, %p317
      %p319 = scmp.ne.s32.totalorder %s311, %s313
      %p320 = scmp.eq.s32.totalorder %s30, 7
      %p321 = por %p319, %p320
      %p322 = scmp.ne.s32.totalorder %s313, %s314
      %p323 = scmp.eq.s32.totalorder %s30, 0
      %p324 = por %p322, %p323
      %p325 = scmp.ne.s32.totalorder %s313, %s314
      %p326 = scmp.eq.s32.totalorder %s31, 7
      %p327 = por %p325, %p326
      %p329 = scmp.ne.s32.totalorder %s314, %s328
      %p330 = scmp.eq.s32.totalorder %s31, 0
      %p331 = por %p329, %p330
      %s333 = sadd.s32 %s332, 1
      %p336 = scmp.eq.s32.totalorder %s25, 7
      %p337 = scmp.ne.s32.totalorder %s332, %s334
      %p338 = scmp.eq.s32.totalorder %s25, 0
      %p339 = por %p337, %p338
      %p340 = scmp.ne.s32.totalorder %s332, %s334
      %p341 = scmp.eq.s32.totalorder %s30, 7
      %p342 = por %p340, %p341
      %p343 = scmp.ne.s32.totalorder %s334, %s335
      %p344 = scmp.eq.s32.totalorder %s30, 0
      %p345 = por %p343, %p344
      %p346 = scmp.ne.s32.totalorder %s334, %s335
      %p347 = scmp.eq.s32.totalorder %s31, 7
      %p348 = por %p346, %p347
      %p350 = scmp.ne.s32.totalorder %s335, %s349
      %p351 = scmp.eq.s32.totalorder %s31, 0
      %p352 = por %p350, %p351
      %s354 = sadd.s32 %s353, 1
      %p357 = scmp.eq.s32.totalorder %s25, 7
      %p358 = scmp.ne.s32.totalorder %s353, %s355
      %p359 = scmp.eq.s32.totalorder %s25, 0
      %p360 = por %p358, %p359
      %p361 = scmp.ne.s32.totalorder %s353, %s355
      %p362 = scmp.eq.s32.totalorder %s30, 7
      %p363 = por %p361, %p362
      %p364 = scmp.ne.s32.totalorder %s355, %s356
      %p365 = scmp.eq.s32.totalorder %s30, 0
      %p366 = por %p364, %p365
      %p367 = scmp.ne.s32.totalorder %s355, %s356
      %p368 = scmp.eq.s32.totalorder %s31, 7
      %p369 = por %p367, %p368
      %p371 = scmp.ne.s32.totalorder %s356, %s370
      %p372 = scmp.eq.s32.totalorder %s31, 0
      %p373 = por %p371, %p372
      %p374 = scmp.le.s32.totalorder 1, %s25
      %p375 = scmp.lt.s32.totalorder %s25, 9
      %p376 = pnand %p374, %p375
      %p377 = pneg %p376
      // Predicated region
      $region9: #{_gcn_lstm_run.1} parent=5 // pred_check
        _
      $region10: #{_gcn_lstm_run.1} parent=5 // pred_check_branch
        %379 = sbr.rel (%p376) target = $region12
      $region11: #{_gcn_lstm_run.1} parent=5 // pred_region
        %s380 = ssub.s32 %s25, 1
        // Predicated region
        $region13: #{_gcn_lstm_run.1} parent=11 // pred_check
          %p381 = pneg %p72
        $region14: #{_gcn_lstm_run.1} parent=11 // pred_check_branch
          %383 = sbr.rel (%p381) target = $region16
        $region15: #{_gcn_lstm_run.1} parent=11 // pred_region
          _
        $region16: #{_gcn_lstm_run.1} parent=11 // pred_fallthru
          _
        // Predicated region
        $region17: #{_gcn_lstm_run.1} parent=11 // pred_check
          %p384 = pneg %p93
        $region18: #{_gcn_lstm_run.1} parent=11 // pred_check_branch
          %386 = sbr.rel (%p384) target = $region20
        $region19: #{_gcn_lstm_run.1} parent=11 // pred_region
          _
        $region20: #{_gcn_lstm_run.1} parent=11 // pred_fallthru
          _
        // Predicated region
        $region21: #{_gcn_lstm_run.1} parent=11 // pred_check
          %p387 = pneg %p114
        $region22: #{_gcn_lstm_run.1} parent=11 // pred_check_branch
          %389 = sbr.rel (%p387) target = $region24
        $region23: #{_gcn_lstm_run.1} parent=11 // pred_region
          _
        $region24: #{_gcn_lstm_run.1} parent=11 // pred_fallthru
          _
        // Predicated region
        $region25: #{_gcn_lstm_run.1} parent=11 // pred_check
          %p390 = pneg %p135
        $region26: #{_gcn_lstm_run.1} parent=11 // pred_check_branch
          %392 = sbr.rel (%p390) target = $region28
        $region27: #{_gcn_lstm_run.1} parent=11 // pred_region
          _
        $region28: #{_gcn_lstm_run.1} parent=11 // pred_fallthru
          _
        // Predicated region
        $region29: #{_gcn_lstm_run.1} parent=11 // pred_check
          %p393 = pneg %p156
        $region30: #{_gcn_lstm_run.1} parent=11 // pred_check_branch
          %395 = sbr.rel (%p393) target = $region32
        $region31: #{_gcn_lstm_run.1} parent=11 // pred_region
          _
        $region32: #{_gcn_lstm_run.1} parent=11 // pred_fallthru
          _
        // Predicated region
        $region33: #{_gcn_lstm_run.1} parent=11 // pred_check
          %p396 = pneg %p177
        $region34: #{_gcn_lstm_run.1} parent=11 // pred_check_branch
          %398 = sbr.rel (%p396) target = $region36
        $region35: #{_gcn_lstm_run.1} parent=11 // pred_region
          _
        $region36: #{_gcn_lstm_run.1} parent=11 // pred_fallthru
          _
        // Predicated region
        $region37: #{_gcn_lstm_run.1} parent=11 // pred_check
          %p399 = pneg %p198
        $region38: #{_gcn_lstm_run.1} parent=11 // pred_check_branch
          %401 = sbr.rel (%p399) target = $region40
        $region39: #{_gcn_lstm_run.1} parent=11 // pred_region
          _
        $region40: #{_gcn_lstm_run.1} parent=11 // pred_fallthru
          _
        // Predicated region
        $region41: #{_gcn_lstm_run.1} parent=11 // pred_check
          %p402 = pneg %p219
        $region42: #{_gcn_lstm_run.1} parent=11 // pred_check_branch
          %404 = sbr.rel (%p402) target = $region44
        $region43: #{_gcn_lstm_run.1} parent=11 // pred_region
          _
        $region44: #{_gcn_lstm_run.1} parent=11 // pred_fallthru
          _
        // Predicated region
        $region45: #{_gcn_lstm_run.1} parent=11 // pred_check
          %p405 = pneg %p240
        $region46: #{_gcn_lstm_run.1} parent=11 // pred_check_branch
          %407 = sbr.rel (%p405) target = $region48
        $region47: #{_gcn_lstm_run.1} parent=11 // pred_region
          _
        $region48: #{_gcn_lstm_run.1} parent=11 // pred_fallthru
          _
        // Predicated region
        $region49: #{_gcn_lstm_run.1} parent=11 // pred_check
          %p408 = pneg %p261
        $region50: #{_gcn_lstm_run.1} parent=11 // pred_check_branch
          %410 = sbr.rel (%p408) target = $region52
        $region51: #{_gcn_lstm_run.1} parent=11 // pred_region
          _
        $region52: #{_gcn_lstm_run.1} parent=11 // pred_fallthru
          _
        // Predicated region
        $region53: #{_gcn_lstm_run.1} parent=11 // pred_check
          %p411 = pneg %p282
        $region54: #{_gcn_lstm_run.1} parent=11 // pred_check_branch
          %413 = sbr.rel (%p411) target = $region56
        $region55: #{_gcn_lstm_run.1} parent=11 // pred_region
          _
        $region56: #{_gcn_lstm_run.1} parent=11 // pred_fallthru
          _
      $region12: #{_gcn_lstm_run.1} parent=5 // pred_fallthru
        _
      %p414 = scmp.lt.s32.totalorder %s25, 8
      // Predicated region
      $region57: #{_gcn_lstm_run.1} parent=5 // pred_check
        %p415 = pneg %p414
      $region58: #{_gcn_lstm_run.1} parent=5 // pred_check_branch
        %417 = sbr.rel (%p415) target = $region60
      $region59: #{_gcn_lstm_run.1} parent=5 // pred_region
        // Predicated region
        $region61: #{_gcn_lstm_run.1} parent=59 // pred_check
          %p418 = pneg %p45
        $region62: #{_gcn_lstm_run.1} parent=59 // pred_check_branch
          %420 = sbr.rel (%p418) target = $region64
        $region63: #{_gcn_lstm_run.1} parent=59 // pred_region
          %p421 = scmp.lt.s32.totalorder %s25, 7
          %s422 = scalar_select %p421, %s25, 7
          %s423 = smul.addr %s422, 4
          %s424 = smul.addr %s423, 8
          %s425 = scalar_lea.vmem %s0, %s424
        $region64: #{_gcn_lstm_run.1} parent=59 // pred_fallthru
          _
      $region60: #{_gcn_lstm_run.1} parent=5 // pred_fallthru
        _
      %p426 = scmp.le.s32.totalorder 1, %s25
      %p427 = scmp.lt.s32.totalorder %s25, 9
      %p428 = pnand %p426, %p427
      %p429 = pneg %p428
      // Predicated region
      $region65: #{_gcn_lstm_run.1} parent=5 // pred_check
        _
      $region66: #{_gcn_lstm_run.1} parent=5 // pred_check_branch
        %431 = sbr.rel (%p428) target = $region68
      $region67: #{_gcn_lstm_run.1} parent=5 // pred_region
        %s432 = ssub.s32 %s25, 1
        %p433 = scmp.lt.s32.totalorder %s30, 7
        %s434 = scalar_select %p433, %s30, 7
        %s435 = smul.addr %s434, 4
        %s436 = smul.addr %s435, 8
        %s437 = scalar_lea.vmem %s0, %s436
        %p438 = pneg %p51
        %p439 = pneg %p48
        %p440 = pneg %p72
        %p441 = pneg %p69
        %p442 = pneg %p93
        %p443 = pneg %p90
        %p444 = pneg %p114
        %p445 = pneg %p111
        %p446 = pneg %p135
        %p447 = pneg %p132
        %p448 = pneg %p156
        %p449 = pneg %p153
        %p450 = pneg %p177
        %p451 = pneg %p174
        %p452 = pneg %p198
        %p453 = pneg %p195
        %p454 = pneg %p219
        %p455 = pneg %p216
        %p456 = pneg %p240
        %p457 = pneg %p237
        %p458 = pneg %p261
        %p459 = pneg %p258
        %p460 = pneg %p282
        %p461 = pneg %p279
        %p462 = pneg %p303
        %p463 = pneg %p300
        %p464 = pneg %p324
        %p465 = pneg %p321
        %p466 = pneg %p345
        %p467 = pneg %p342
        %p468 = pneg %p366
        %p469 = pneg %p363
        %p470 = scmp.lt.s32.totalorder %s30, 7
        %s471 = scalar_select %p470, %s30, 7
        %s472 = smul.addr %s471, 4
        %s473 = smul.addr %s472, 8
        %s474 = scalar_lea.vmem %s0, %s473
        %p475 = scmp.eq.s32.totalorder %s30, 0
        // Predicated region
        $region69: #{_gcn_lstm_run.1} parent=67 // pred_check
          %p476 = pneg %p475
        $region70: #{_gcn_lstm_run.1} parent=67 // pred_check_branch
          %478 = sbr.rel (%p476) target = $region72
        $region71: #{_gcn_lstm_run.1} parent=67 // pred_region
          %v479 = vld [vmem:[%s5] sm:$0xff]
          %v480 = vld [vmem:[%s5 + $0x8] sm:$0xff]
          %v481 = vld [vmem:[%s5 + $0x10] sm:$0xff]
          %v482 = vld [vmem:[%s5 + $0x18] sm:$0xff]
          %vm483 = vcmask 261120
          %484 = vst.msk [vmem:[#allocation2] sm:$0xff] %vm483, %v479
          %485 = vst.msk [vmem:[#allocation2 + $0x8] sm:$0xff] %vm483, %v480
          %486 = vst.msk [vmem:[#allocation2 + $0x10] sm:$0xff] %vm483, %v481
          %487 = vst.msk [vmem:[#allocation2 + $0x18] sm:$0xff] %vm483, %v482
          %v488 = vld [vmem:[%s6] sm:$0xff]
          %v489 = vld [vmem:[%s6 + $0x8] sm:$0xff]
          %v490 = vld [vmem:[%s6 + $0x10] sm:$0xff]
          %v491 = vld [vmem:[%s6 + $0x18] sm:$0xff]
          %492 = vst.msk [vmem:[#allocation4] sm:$0xff] %vm483, %v488
          %493 = vst.msk [vmem:[#allocation4 + $0x8] sm:$0xff] %vm483, %v489
          %494 = vst.msk [vmem:[#allocation4 + $0x10] sm:$0xff] %vm483, %v490
          %495 = vst.msk [vmem:[#allocation4 + $0x18] sm:$0xff] %vm483, %v491
          %v496 = vld [vmem:[%s10] sm:$0xff]
          %v497 = vld [vmem:[%s10 + $0x8] sm:$0xff]
          %v498 = vld [vmem:[%s10 + $0x10] sm:$0xff]
          %v499 = vld [vmem:[%s10 + $0x18] sm:$0xff]
          %500 = vst.msk [vmem:[#allocation6] sm:$0xff] %vm483, %v496
          %501 = vst.msk [vmem:[#allocation6 + $0x8] sm:$0xff] %vm483, %v497
          %502 = vst.msk [vmem:[#allocation6 + $0x10] sm:$0xff] %vm483, %v498
          %503 = vst.msk [vmem:[#allocation6 + $0x18] sm:$0xff] %vm483, %v499
          %v504 = vld [vmem:[%s11] sm:$0xff]
          %v505 = vld [vmem:[%s11 + $0x8] sm:$0xff]
          %v506 = vld [vmem:[%s11 + $0x10] sm:$0xff]
          %v507 = vld [vmem:[%s11 + $0x18] sm:$0xff]
          %508 = vst.msk [vmem:[#allocation7] sm:$0xff] %vm483, %v504
          %509 = vst.msk [vmem:[#allocation7 + $0x8] sm:$0xff] %vm483, %v505
          %510 = vst.msk [vmem:[#allocation7 + $0x10] sm:$0xff] %vm483, %v506
          %511 = vst.msk [vmem:[#allocation7 + $0x18] sm:$0xff] %vm483, %v507
        $region72: #{_gcn_lstm_run.1} parent=67 // pred_fallthru
          _
        %v512 = vld [vmem:[%s1] sm:$0xff]
        %v513 = vld [vmem:[%s1 + $0x8] sm:$0xff]
        %v514 = vld [vmem:[%s1 + $0x10] sm:$0xff]
        %v515 = vld [vmem:[%s1 + $0x18] sm:$0xff]
        %v516 = vld [vmem:[%s474] sm:$0xff]
        %v517 = vld [vmem:[%s474 + $0x8] sm:$0xff]
        %v518 = vld [vmem:[%s474 + $0x10] sm:$0xff]
        %v519 = vld [vmem:[%s474 + $0x18] sm:$0xff]
        %v520 = vld [vmem:[%s2] sm:$0xf]
        %v521 = vld [vmem:[#allocation2] sm:$0xff]
        %v522 = vld [vmem:[#allocation2 + $0x8] sm:$0xff]
        %v523 = vld [vmem:[#allocation2 + $0x10] sm:$0xff]
        %v524 = vld [vmem:[#allocation2 + $0x18] sm:$0xff]
        %v525 = vld [vmem:[%s3] sm:$0xff]
        %v526 = vld [vmem:[%s3 + $0x8] sm:$0xff]
        %v527 = vld [vmem:[%s3 + $0x10] sm:$0xff]
        %v528 = vld [vmem:[%s3 + $0x18] sm:$0xff]
        %vm529 = vcmask 261120
        %v531 = vsel %vm529, %v521, 0
        %v534 = vsel %vm529, %v522, 0
        %v537 = vsel %vm529, %v523, 0
        %v540 = vsel %vm529, %v524, 0
        %542 = vmatpush.msra.mxu0 0.0
        %543 = vmatpush.msra.mxu0 0.0
        %544 = vmatpush.msra.mxu0 0.0
        %545 = vmatpush.msra.mxu0 0.0
        %546 = vmatpush.msra.mxu0 0.0
        %547 = vmatpush.msra.mxu0 0.0
        %548 = vmatpush.msra.mxu0 0.0
        %549 = vmatpush.msra.mxu0 0.0
        %550 = vmatpush.msra.mxu0 0.0
        %551 = vmatpush.msra.mxu0 0.0
        %552 = vmatpush.msra.mxu0 0.0
        %553 = vmatpush.msra.mxu0 0.0
        %554 = vmatpush.msra.mxu0 %v528
        %555 = vmatpush.msra.mxu0 %v527
        %556 = vmatpush.msra.mxu0 %v526
        %557 = vmatpush.msra.mxu0 %v525
        %558 = vmatmul.f32.gmra.mxu0 %v531
        %v559 = vpop.f32.mrf.mxu0
        %v560 = vadd.f32 0.0, %v559
        %561 = vmatmul.f32.gmra.mxu0 %v534
        %v562 = vpop.f32.mrf.mxu0
        %v563 = vadd.f32 0.0, %v562
        %564 = vmatmul.f32.gmra.mxu0 %v537
        %v565 = vpop.f32.mrf.mxu0
        %v566 = vadd.f32 0.0, %v565
        %567 = vmatmul.f32.gmra.mxu0 %v540
        %v568 = vpop.f32.mrf.mxu0
        %v569 = vadd.f32 0.0, %v568
        %570 = vdwg.mxu0
        %vm571 = vcmask 31744
        %v573 = vsel %vm571, %v516, 0
        %v576 = vsel %vm571, %v517, 0
        %v579 = vsel %vm571, %v518, 0
        %v582 = vsel %vm571, %v519, 0
        %vm584 = vcmask 1043456
        %v586 = vsel %vm584, %v520, 0
        %588 = vmatpush.msra.mxu0 0.0
        %589 = vmatpush.msra.mxu0 0.0
        %590 = vmatpush.msra.mxu0 0.0
        %591 = vmatpush.msra.mxu0 0.0
        %592 = vmatpush.msra.mxu0 0.0
        %593 = vmatpush.msra.mxu0 0.0
        %594 = vmatpush.msra.mxu0 0.0
        %595 = vmatpush.msra.mxu0 0.0
        %596 = vmatpush.msra.mxu0 0.0
        %597 = vmatpush.msra.mxu0 0.0
        %598 = vmatpush.msra.mxu0 0.0
        %599 = vmatpush.msra.mxu0 0.0
        %600 = vmatpush.msra.mxu0 0.0
        %601 = vmatpush.msra.mxu0 0.0
        %602 = vmatpush.msra.mxu0 0.0
        %603 = vmatpush.msra.mxu0 %v586
        %604 = vmatmul.f32.gmra.mxu0 %v573
        %v605 = vpop.f32.mrf.mxu0
        %v606 = vadd.f32 %v560, %v605
        %607 = vmatmul.f32.gmra.mxu0 %v576
        %v608 = vpop.f32.mrf.mxu0
        %v609 = vadd.f32 %v563, %v608
        %610 = vmatmul.f32.gmra.mxu0 %v579
        %v611 = vpop.f32.mrf.mxu0
        %v612 = vadd.f32 %v566, %v611
        %613 = vmatmul.f32.gmra.mxu0 %v582
        %v614 = vpop.f32.mrf.mxu0
        %v615 = vadd.f32 %v569, %v614
        %616 = vdwg.mxu0
        %v617 = vld [vmem:[%s4] sm:$0x1]
        %v619 = vperm.slane %v617, 0
        %v621 = vadd.f32 %v606, %v619
        %v622 = vadd.f32 %v609, %v619
        %v623 = vadd.f32 %v612, %v619
        %v624 = vadd.f32 %v615, %v619
        %v626 = vsel %vm529, %v512, 0
        %v629 = vsel %vm529, %v513, 0
        %v632 = vsel %vm529, %v514, 0
        %v635 = vsel %vm529, %v515, 0
        %637 = vmatpush.msra.mxu0 0.0
        %638 = vmatpush.msra.mxu0 0.0
        %639 = vmatpush.msra.mxu0 0.0
        %640 = vmatpush.msra.mxu0 0.0
        %641 = vmatpush.msra.mxu0 0.0
        %642 = vmatpush.msra.mxu0 0.0
        %643 = vmatpush.msra.mxu0 0.0
        %644 = vmatpush.msra.mxu0 0.0
        %645 = vmatpush.msra.mxu0 0.0
        %646 = vmatpush.msra.mxu0 0.0
        %647 = vmatpush.msra.mxu0 0.0
        %648 = vmatpush.msra.mxu0 0.0
        %649 = vmatpush.msra.mxu0 %v624
        %650 = vmatpush.msra.mxu0 %v623
        %651 = vmatpush.msra.mxu0 %v622
        %652 = vmatpush.msra.mxu0 %v621
        %653 = vmatmul.f32.gmra.mxu0 %v626
        %v654 = vpop.f32.mrf.mxu0
        %v655 = vadd.f32 0.0, %v654
        %656 = vmatmul.f32.gmra.mxu0 %v629
        %v657 = vpop.f32.mrf.mxu0
        %v658 = vadd.f32 0.0, %v657
        %659 = vmatmul.f32.gmra.mxu0 %v632
        %v660 = vpop.f32.mrf.mxu0
        %v661 = vadd.f32 0.0, %v660
        %662 = vmatmul.f32.gmra.mxu0 %v635
        %v663 = vpop.f32.mrf.mxu0
        %v664 = vadd.f32 0.0, %v663
        %665 = vdwg.mxu0
        %v666 = vxor.u32 %v655, 2147483648
        %v667 = vxor.u32 %v658, 2147483648
        %v668 = vxor.u32 %v661, 2147483648
        %v669 = vxor.u32 %v664, 2147483648
        %v670 = vmul.f32 %v666, 1.442695
        %v671 = vpow.pop %v670
        %v672 = vmul.f32 %v667, 1.442695
        %v673 = vpow.pop %v672
        %v674 = vmul.f32 %v668, 1.442695
        %v675 = vpow.pop %v674
        %v676 = vmul.f32 %v669, 1.442695
        %v677 = vpow.pop %v676
        %v678 = vadd.f32 %v671, 1.0
        %v679 = vadd.f32 %v673, 1.0
        %v680 = vadd.f32 %v675, 1.0
        %v681 = vadd.f32 %v677, 1.0
        %v682 = vrcp.pop %v678
        %v683 = vmul.f32 %v678, %v682
        %v684 = vsub.f32 1.0, %v683
        %v685 = vmul.f32 %v682, %v684
        %v686 = vadd.f32 %v682, %v685
        %vm687 = vweird.f32 %v678
        %vm688 = vweird.f32 %v682
        %vm689 = vmor %vm687, %vm688
        %v690 = vsel %vm689, %v682, %v686
        %v691 = vand.u32 2147483647, %v678
        %vm692 = vcmp.eq.f32.partialorder %v691, 8.507059e+37
        %v693 = vand.u32 %v678, 2147483648
        %v694 = vor.u32 1.1754944e-38, %v693
        %v695 = vsel %vm692, %v694, %v690
        %v696 = vmul.f32 1.0, %v695
        %v697 = vrcp.pop %v679
        %v698 = vmul.f32 %v679, %v697
        %v699 = vsub.f32 1.0, %v698
        %v700 = vmul.f32 %v697, %v699
        %v701 = vadd.f32 %v697, %v700
        %vm702 = vweird.f32 %v679
        %vm703 = vweird.f32 %v697
        %vm704 = vmor %vm702, %vm703
        %v705 = vsel %vm704, %v697, %v701
        %v706 = vand.u32 2147483647, %v679
        %vm707 = vcmp.eq.f32.partialorder %v706, 8.507059e+37
        %v708 = vand.u32 %v679, 2147483648
        %v709 = vor.u32 1.1754944e-38, %v708
        %v710 = vsel %vm707, %v709, %v705
        %v711 = vmul.f32 1.0, %v710
        %v712 = vrcp.pop %v680
        %v713 = vmul.f32 %v680, %v712
        %v714 = vsub.f32 1.0, %v713
        %v715 = vmul.f32 %v712, %v714
        %v716 = vadd.f32 %v712, %v715
        %vm717 = vweird.f32 %v680
        %vm718 = vweird.f32 %v712
        %vm719 = vmor %vm717, %vm718
        %v720 = vsel %vm719, %v712, %v716
        %v721 = vand.u32 2147483647, %v680
        %vm722 = vcmp.eq.f32.partialorder %v721, 8.507059e+37
        %v723 = vand.u32 %v680, 2147483648
        %v724 = vor.u32 1.1754944e-38, %v723
        %v725 = vsel %vm722, %v724, %v720
        %v726 = vmul.f32 1.0, %v725
        %v727 = vrcp.pop %v681
        %v728 = vmul.f32 %v681, %v727
        %v729 = vsub.f32 1.0, %v728
        %v730 = vmul.f32 %v727, %v729
        %v731 = vadd.f32 %v727, %v730
        %vm732 = vweird.f32 %v681
        %vm733 = vweird.f32 %v727
        %vm734 = vmor %vm732, %vm733
        %v735 = vsel %vm734, %v727, %v731
        %v736 = vand.u32 2147483647, %v681
        %vm737 = vcmp.eq.f32.partialorder %v736, 8.507059e+37
        %v738 = vand.u32 %v681, 2147483648
        %v739 = vor.u32 1.1754944e-38, %v738
        %v740 = vsel %vm737, %v739, %v735
        %v741 = vmul.f32 1.0, %v740
        %v742 = vtanh.pop %v655
        %v743 = vtanh.pop %v658
        %v744 = vtanh.pop %v661
        %v745 = vtanh.pop %v664
        %v746 = vld [vmem:[#allocation4] sm:$0xff]
        %v747 = vld [vmem:[#allocation4 + $0x8] sm:$0xff]
        %v748 = vld [vmem:[#allocation4 + $0x10] sm:$0xff]
        %v749 = vld [vmem:[#allocation4 + $0x18] sm:$0xff]
        %754 = vrot.lane.b32.xlu0 %v746, 32
        %v755 = vpop.permute.xlu0 %754
        %756 = vrot.lane.b32.xlu0 %v747, 32
        %v757 = vpop.permute.xlu0 %756
        %758 = vrot.lane.b32.xlu0 %v748, 32
        %v759 = vpop.permute.xlu0 %758
        %760 = vrot.lane.b32.xlu0 %v749, 32
        %v761 = vpop.permute.xlu0 %760
        %v766 = vmul.f32 %v696, %v755
        %v767 = vmul.f32 %v711, %v757
        %v768 = vmul.f32 %v726, %v759
        %v769 = vmul.f32 %v741, %v761
        %774 = vrot.lane.b32.xlu0 %v742, 32
        %v775 = vpop.permute.xlu0 %774
        %776 = vrot.lane.b32.xlu0 %v743, 32
        %v777 = vpop.permute.xlu0 %776
        %778 = vrot.lane.b32.xlu0 %v744, 32
        %v779 = vpop.permute.xlu0 %778
        %780 = vrot.lane.b32.xlu0 %v745, 32
        %v781 = vpop.permute.xlu0 %780
        %v786 = vmul.f32 %v696, %v775
        %v787 = vmul.f32 %v711, %v777
        %v788 = vmul.f32 %v726, %v779
        %v789 = vmul.f32 %v741, %v781
        %794 = vrot.lane.b32.xlu0 %v786, 32
        %v795 = vpop.permute.xlu0 %794
        %796 = vrot.lane.b32.xlu0 %v787, 32
        %v797 = vpop.permute.xlu0 %796
        %798 = vrot.lane.b32.xlu0 %v788, 32
        %v799 = vpop.permute.xlu0 %798
        %800 = vrot.lane.b32.xlu0 %v789, 32
        %v801 = vpop.permute.xlu0 %800
        %v806 = vadd.f32 %v766, %v795
        %v807 = vadd.f32 %v767, %v797
        %v808 = vadd.f32 %v768, %v799
        %v809 = vadd.f32 %v769, %v801
        %v810 = vtanh.pop %v806
        %v811 = vtanh.pop %v807
        %v812 = vtanh.pop %v808
        %v813 = vtanh.pop %v809
        %818 = vrot.lane.b32.xlu0 %v810, 32
        %v819 = vpop.permute.xlu0 %818
        %820 = vrot.lane.b32.xlu0 %v811, 32
        %v821 = vpop.permute.xlu0 %820
        %822 = vrot.lane.b32.xlu0 %v812, 32
        %v823 = vpop.permute.xlu0 %822
        %824 = vrot.lane.b32.xlu0 %v813, 32
        %v825 = vpop.permute.xlu0 %824
        %v830 = vmul.f32 %v696, %v819
        %v831 = vmul.f32 %v711, %v821
        %v832 = vmul.f32 %v726, %v823
        %v833 = vmul.f32 %v741, %v825
        %838 = vrot.lane.b32.xlu0 %v806, 96
        %v839 = vpop.permute.xlu0 %838
        %840 = vrot.lane.b32.xlu0 %v807, 96
        %v841 = vpop.permute.xlu0 %840
        %842 = vrot.lane.b32.xlu0 %v808, 96
        %v843 = vpop.permute.xlu0 %842
        %844 = vrot.lane.b32.xlu0 %v809, 96
        %v845 = vpop.permute.xlu0 %844
        %850 = vst.msk [vmem:[#allocation4] sm:$0xff] %vm529, %v839
        %851 = vst.msk [vmem:[#allocation4 + $0x8] sm:$0xff] %vm529, %v841
        %852 = vst.msk [vmem:[#allocation4 + $0x10] sm:$0xff] %vm529, %v843
        %853 = vst.msk [vmem:[#allocation4 + $0x18] sm:$0xff] %vm529, %v845
        %858 = vrot.lane.b32.xlu0 %v830, 64
        %v859 = vpop.permute.xlu0 %858
        %860 = vrot.lane.b32.xlu0 %v831, 64
        %v861 = vpop.permute.xlu0 %860
        %862 = vrot.lane.b32.xlu0 %v832, 64
        %v863 = vpop.permute.xlu0 %862
        %864 = vrot.lane.b32.xlu0 %v833, 64
        %v865 = vpop.permute.xlu0 %864
        %870 = vst.msk [vmem:[#allocation2] sm:$0xff] %vm529, %v859
        %871 = vst.msk [vmem:[#allocation2 + $0x8] sm:$0xff] %vm529, %v861
        %872 = vst.msk [vmem:[#allocation2 + $0x10] sm:$0xff] %vm529, %v863
        %873 = vst.msk [vmem:[#allocation2 + $0x18] sm:$0xff] %vm529, %v865
        %v874 = vld [vmem:[%s7] sm:$0xff]
        %v875 = vld [vmem:[%s7 + $0x8] sm:$0xff]
        %v876 = vld [vmem:[%s7 + $0x10] sm:$0xff]
        %v877 = vld [vmem:[%s7 + $0x18] sm:$0xff]
        %v878 = vld [vmem:[#allocation6] sm:$0xff]
        %v879 = vld [vmem:[#allocation6 + $0x8] sm:$0xff]
        %v880 = vld [vmem:[#allocation6 + $0x10] sm:$0xff]
        %v881 = vld [vmem:[#allocation6 + $0x18] sm:$0xff]
        %v882 = vld [vmem:[%s8] sm:$0xff]
        %v883 = vld [vmem:[%s8 + $0x8] sm:$0xff]
        %v884 = vld [vmem:[%s8 + $0x10] sm:$0xff]
        %v885 = vld [vmem:[%s8 + $0x18] sm:$0xff]
        %v887 = vsel %vm529, %v878, 0
        %v890 = vsel %vm529, %v879, 0
        %v893 = vsel %vm529, %v880, 0
        %v896 = vsel %vm529, %v881, 0
        %898 = vmatpush.msra.mxu0 0.0
        %899 = vmatpush.msra.mxu0 0.0
        %900 = vmatpush.msra.mxu0 0.0
        %901 = vmatpush.msra.mxu0 0.0
        %902 = vmatpush.msra.mxu0 0.0
        %903 = vmatpush.msra.mxu0 0.0
        %904 = vmatpush.msra.mxu0 0.0
        %905 = vmatpush.msra.mxu0 0.0
        %906 = vmatpush.msra.mxu0 0.0
        %907 = vmatpush.msra.mxu0 0.0
        %908 = vmatpush.msra.mxu0 0.0
        %909 = vmatpush.msra.mxu0 0.0
        %910 = vmatpush.msra.mxu0 %v885
        %911 = vmatpush.msra.mxu0 %v884
        %912 = vmatpush.msra.mxu0 %v883
        %913 = vmatpush.msra.mxu0 %v882
        %914 = vmatmul.f32.gmra.mxu0 %v887
        %v915 = vpop.f32.mrf.mxu0
        %v916 = vadd.f32 0.0, %v915
        %917 = vmatmul.f32.gmra.mxu0 %v890
        %v918 = vpop.f32.mrf.mxu0
        %v919 = vadd.f32 0.0, %v918
        %920 = vmatmul.f32.gmra.mxu0 %v893
        %v921 = vpop.f32.mrf.mxu0
        %v922 = vadd.f32 0.0, %v921
        %923 = vmatmul.f32.gmra.mxu0 %v896
        %v924 = vpop.f32.mrf.mxu0
        %v925 = vadd.f32 0.0, %v924
        %926 = vdwg.mxu0
        %v927 = vsel %vm529, %v859, 0
        %v929 = vsel %vm529, %v861, 0
        %v931 = vsel %vm529, %v863, 0
        %v933 = vsel %vm529, %v865, 0
        %935 = vmatpush.msra.mxu0 0.0
        %936 = vmatpush.msra.mxu0 0.0
        %937 = vmatpush.msra.mxu0 0.0
        %938 = vmatpush.msra.mxu0 0.0
        %939 = vmatpush.msra.mxu0 0.0
        %940 = vmatpush.msra.mxu0 0.0
        %941 = vmatpush.msra.mxu0 0.0
        %942 = vmatpush.msra.mxu0 0.0
        %943 = vmatpush.msra.mxu0 0.0
        %944 = vmatpush.msra.mxu0 0.0
        %945 = vmatpush.msra.mxu0 0.0
        %946 = vmatpush.msra.mxu0 0.0
        %947 = vmatpush.msra.mxu0 %v877
        %948 = vmatpush.msra.mxu0 %v876
        %949 = vmatpush.msra.mxu0 %v875
        %950 = vmatpush.msra.mxu0 %v874
        %951 = vmatmul.f32.gmra.mxu0 %v927
        %v952 = vpop.f32.mrf.mxu0
        %v953 = vadd.f32 %v916, %v952
        %954 = vmatmul.f32.gmra.mxu0 %v929
        %v955 = vpop.f32.mrf.mxu0
        %v956 = vadd.f32 %v919, %v955
        %957 = vmatmul.f32.gmra.mxu0 %v931
        %v958 = vpop.f32.mrf.mxu0
        %v959 = vadd.f32 %v922, %v958
        %960 = vmatmul.f32.gmra.mxu0 %v933
        %v961 = vpop.f32.mrf.mxu0
        %v962 = vadd.f32 %v925, %v961
        %963 = vdwg.mxu0
        %v964 = vld [vmem:[%s9] sm:$0x1]
        %v966 = vperm.slane %v964, 0
        %v968 = vadd.f32 %v953, %v966
        %v969 = vadd.f32 %v956, %v966
        %v970 = vadd.f32 %v959, %v966
        %v971 = vadd.f32 %v962, %v966
        %972 = vmatpush.msra.mxu0 0.0
        %973 = vmatpush.msra.mxu0 0.0
        %974 = vmatpush.msra.mxu0 0.0
        %975 = vmatpush.msra.mxu0 0.0
        %976 = vmatpush.msra.mxu0 0.0
        %977 = vmatpush.msra.mxu0 0.0
        %978 = vmatpush.msra.mxu0 0.0
        %979 = vmatpush.msra.mxu0 0.0
        %980 = vmatpush.msra.mxu0 0.0
        %981 = vmatpush.msra.mxu0 0.0
        %982 = vmatpush.msra.mxu0 0.0
        %983 = vmatpush.msra.mxu0 0.0
        %984 = vmatpush.msra.mxu0 %v971
        %985 = vmatpush.msra.mxu0 %v970
        %986 = vmatpush.msra.mxu0 %v969
        %987 = vmatpush.msra.mxu0 %v968
        %988 = vmatmul.f32.gmra.mxu0 %v626
        %v989 = vpop.f32.mrf.mxu0
        %v990 = vadd.f32 0.0, %v989
        %991 = vmatmul.f32.gmra.mxu0 %v629
        %v992 = vpop.f32.mrf.mxu0
        %v993 = vadd.f32 0.0, %v992
        %994 = vmatmul.f32.gmra.mxu0 %v632
        %v995 = vpop.f32.mrf.mxu0
        %v996 = vadd.f32 0.0, %v995
        %997 = vmatmul.f32.gmra.mxu0 %v635
        %v998 = vpop.f32.mrf.mxu0
        %v999 = vadd.f32 0.0, %v998
        %1000 = vdwg.mxu0
        %v1001 = vxor.u32 %v990, 2147483648
        %v1002 = vxor.u32 %v993, 2147483648
        %v1003 = vxor.u32 %v996, 2147483648
        %v1004 = vxor.u32 %v999, 2147483648
        %v1005 = vmul.f32 %v1001, 1.442695
        %v1006 = vpow.pop %v1005
        %v1007 = vmul.f32 %v1002, 1.442695
        %v1008 = vpow.pop %v1007
        %v1009 = vmul.f32 %v1003, 1.442695
        %v1010 = vpow.pop %v1009
        %v1011 = vmul.f32 %v1004, 1.442695
        %v1012 = vpow.pop %v1011
        %v1013 = vadd.f32 %v1006, 1.0
        %v1014 = vadd.f32 %v1008, 1.0
        %v1015 = vadd.f32 %v1010, 1.0
        %v1016 = vadd.f32 %v1012, 1.0
        %v1017 = vrcp.pop %v1013
        %v1018 = vmul.f32 %v1013, %v1017
        %v1019 = vsub.f32 1.0, %v1018
        %v1020 = vmul.f32 %v1017, %v1019
        %v1021 = vadd.f32 %v1017, %v1020
        %vm1022 = vweird.f32 %v1013
        %vm1023 = vweird.f32 %v1017
        %vm1024 = vmor %vm1022, %vm1023
        %v1025 = vsel %vm1024, %v1017, %v1021
        %v1026 = vand.u32 2147483647, %v1013
        %vm1027 = vcmp.eq.f32.partialorder %v1026, 8.507059e+37
        %v1028 = vand.u32 %v1013, 2147483648
        %v1029 = vor.u32 1.1754944e-38, %v1028
        %v1030 = vsel %vm1027, %v1029, %v1025
        %v1031 = vmul.f32 1.0, %v1030
        %v1032 = vrcp.pop %v1014
        %v1033 = vmul.f32 %v1014, %v1032
        %v1034 = vsub.f32 1.0, %v1033
        %v1035 = vmul.f32 %v1032, %v1034
        %v1036 = vadd.f32 %v1032, %v1035
        %vm1037 = vweird.f32 %v1014
        %vm1038 = vweird.f32 %v1032
        %vm1039 = vmor %vm1037, %vm1038
        %v1040 = vsel %vm1039, %v1032, %v1036
        %v1041 = vand.u32 2147483647, %v1014
        %vm1042 = vcmp.eq.f32.partialorder %v1041, 8.507059e+37
        %v1043 = vand.u32 %v1014, 2147483648
        %v1044 = vor.u32 1.1754944e-38, %v1043
        %v1045 = vsel %vm1042, %v1044, %v1040
        %v1046 = vmul.f32 1.0, %v1045
        %v1047 = vrcp.pop %v1015
        %v1048 = vmul.f32 %v1015, %v1047
        %v1049 = vsub.f32 1.0, %v1048
        %v1050 = vmul.f32 %v1047, %v1049
        %v1051 = vadd.f32 %v1047, %v1050
        %vm1052 = vweird.f32 %v1015
        %vm1053 = vweird.f32 %v1047
        %vm1054 = vmor %vm1052, %vm1053
        %v1055 = vsel %vm1054, %v1047, %v1051
        %v1056 = vand.u32 2147483647, %v1015
        %vm1057 = vcmp.eq.f32.partialorder %v1056, 8.507059e+37
        %v1058 = vand.u32 %v1015, 2147483648
        %v1059 = vor.u32 1.1754944e-38, %v1058
        %v1060 = vsel %vm1057, %v1059, %v1055
        %v1061 = vmul.f32 1.0, %v1060
        %v1062 = vrcp.pop %v1016
        %v1063 = vmul.f32 %v1016, %v1062
        %v1064 = vsub.f32 1.0, %v1063
        %v1065 = vmul.f32 %v1062, %v1064
        %v1066 = vadd.f32 %v1062, %v1065
        %vm1067 = vweird.f32 %v1016
        %vm1068 = vweird.f32 %v1062
        %vm1069 = vmor %vm1067, %vm1068
        %v1070 = vsel %vm1069, %v1062, %v1066
        %v1071 = vand.u32 2147483647, %v1016
        %vm1072 = vcmp.eq.f32.partialorder %v1071, 8.507059e+37
        %v1073 = vand.u32 %v1016, 2147483648
        %v1074 = vor.u32 1.1754944e-38, %v1073
        %v1075 = vsel %vm1072, %v1074, %v1070
        %v1076 = vmul.f32 1.0, %v1075
        %v1077 = vtanh.pop %v990
        %v1078 = vtanh.pop %v993
        %v1079 = vtanh.pop %v996
        %v1080 = vtanh.pop %v999
        %v1081 = vld [vmem:[#allocation7] sm:$0xff]
        %v1082 = vld [vmem:[#allocation7 + $0x8] sm:$0xff]
        %v1083 = vld [vmem:[#allocation7 + $0x10] sm:$0xff]
        %v1084 = vld [vmem:[#allocation7 + $0x18] sm:$0xff]
        %1089 = vrot.lane.b32.xlu0 %v1081, 32
        %v1090 = vpop.permute.xlu0 %1089
        %1091 = vrot.lane.b32.xlu0 %v1082, 32
        %v1092 = vpop.permute.xlu0 %1091
        %1093 = vrot.lane.b32.xlu0 %v1083, 32
        %v1094 = vpop.permute.xlu0 %1093
        %1095 = vrot.lane.b32.xlu0 %v1084, 32
        %v1096 = vpop.permute.xlu0 %1095
        %v1101 = vmul.f32 %v1031, %v1090
        %v1102 = vmul.f32 %v1046, %v1092
        %v1103 = vmul.f32 %v1061, %v1094
        %v1104 = vmul.f32 %v1076, %v1096
        %1109 = vrot.lane.b32.xlu0 %v1077, 32
        %v1110 = vpop.permute.xlu0 %1109
        %1111 = vrot.lane.b32.xlu0 %v1078, 32
        %v1112 = vpop.permute.xlu0 %1111
        %1113 = vrot.lane.b32.xlu0 %v1079, 32
        %v1114 = vpop.permute.xlu0 %1113
        %1115 = vrot.lane.b32.xlu0 %v1080, 32
        %v1116 = vpop.permute.xlu0 %1115
        %v1121 = vmul.f32 %v1031, %v1110
        %v1122 = vmul.f32 %v1046, %v1112
        %v1123 = vmul.f32 %v1061, %v1114
        %v1124 = vmul.f32 %v1076, %v1116
        %1129 = vrot.lane.b32.xlu0 %v1121, 32
        %v1130 = vpop.permute.xlu0 %1129
        %1131 = vrot.lane.b32.xlu0 %v1122, 32
        %v1132 = vpop.permute.xlu0 %1131
        %1133 = vrot.lane.b32.xlu0 %v1123, 32
        %v1134 = vpop.permute.xlu0 %1133
        %1135 = vrot.lane.b32.xlu0 %v1124, 32
        %v1136 = vpop.permute.xlu0 %1135
        %v1141 = vadd.f32 %v1101, %v1130
        %v1142 = vadd.f32 %v1102, %v1132
        %v1143 = vadd.f32 %v1103, %v1134
        %v1144 = vadd.f32 %v1104, %v1136
        %v1145 = vtanh.pop %v1141
        %v1146 = vtanh.pop %v1142
        %v1147 = vtanh.pop %v1143
        %v1148 = vtanh.pop %v1144
        %1153 = vrot.lane.b32.xlu0 %v1145, 32
        %v1154 = vpop.permute.xlu0 %1153
        %1155 = vrot.lane.b32.xlu0 %v1146, 32
        %v1156 = vpop.permute.xlu0 %1155
        %1157 = vrot.lane.b32.xlu0 %v1147, 32
        %v1158 = vpop.permute.xlu0 %1157
        %1159 = vrot.lane.b32.xlu0 %v1148, 32
        %v1160 = vpop.permute.xlu0 %1159
        %v1165 = vmul.f32 %v1031, %v1154
        %v1166 = vmul.f32 %v1046, %v1156
        %v1167 = vmul.f32 %v1061, %v1158
        %v1168 = vmul.f32 %v1076, %v1160
        %1173 = vrot.lane.b32.xlu0 %v1141, 96
        %v1174 = vpop.permute.xlu0 %1173
        %1175 = vrot.lane.b32.xlu0 %v1142, 96
        %v1176 = vpop.permute.xlu0 %1175
        %1177 = vrot.lane.b32.xlu0 %v1143, 96
        %v1178 = vpop.permute.xlu0 %1177
        %1179 = vrot.lane.b32.xlu0 %v1144, 96
        %v1180 = vpop.permute.xlu0 %1179
        %1185 = vst.msk [vmem:[#allocation7] sm:$0xff] %vm529, %v1174
        %1186 = vst.msk [vmem:[#allocation7 + $0x8] sm:$0xff] %vm529, %v1176
        %1187 = vst.msk [vmem:[#allocation7 + $0x10] sm:$0xff] %vm529, %v1178
        %1188 = vst.msk [vmem:[#allocation7 + $0x18] sm:$0xff] %vm529, %v1180
        %1193 = vrot.lane.b32.xlu0 %v1165, 64
        %v1194 = vpop.permute.xlu0 %1193
        %1195 = vrot.lane.b32.xlu0 %v1166, 64
        %v1196 = vpop.permute.xlu0 %1195
        %1197 = vrot.lane.b32.xlu0 %v1167, 64
        %v1198 = vpop.permute.xlu0 %1197
        %1199 = vrot.lane.b32.xlu0 %v1168, 64
        %v1200 = vpop.permute.xlu0 %1199
        %1205 = vst.msk [vmem:[#allocation6] sm:$0xff] %vm529, %v1194
        %1206 = vst.msk [vmem:[#allocation6 + $0x8] sm:$0xff] %vm529, %v1196
        %1207 = vst.msk [vmem:[#allocation6 + $0x10] sm:$0xff] %vm529, %v1198
        %1208 = vst.msk [vmem:[#allocation6 + $0x18] sm:$0xff] %vm529, %v1200
        // Predicated region
        $region73: #{_gcn_lstm_run.1} parent=67 // pred_check
          %p1209 = pneg %p300
        $region74: #{_gcn_lstm_run.1} parent=67 // pred_check_branch
          %1211 = sbr.rel (%p1209) target = $region76
        $region75: #{_gcn_lstm_run.1} parent=67 // pred_region
          %1213 = vsyncadd [#allocation3], 0
          %s1214 = sshll.u32 [#allocation2], 4
          %s1215 = int_to_ptr.vmem [resolvable:$true] %s1214
          %s1216 = sshll.u32 %s12, 4
          %s1217 = int_to_ptr.hbm [resolvable:$true] %s1216
          %1222 = dma.vmem_to_hbm [thread:$0]  %s1215, 512, %s1217, [#allocation3], 128, 128, 8
        $region76: #{_gcn_lstm_run.1} parent=67 // pred_fallthru
          _
        // Predicated region
        $region77: #{_gcn_lstm_run.1} parent=67 // pred_check
          %p1223 = pneg %p321
        $region78: #{_gcn_lstm_run.1} parent=67 // pred_check_branch
          %1225 = sbr.rel (%p1223) target = $region80
        $region79: #{_gcn_lstm_run.1} parent=67 // pred_region
          %1227 = vsyncadd [#allocation5], 0
          %s1228 = sshll.u32 [#allocation4], 4
          %s1229 = int_to_ptr.vmem [resolvable:$true] %s1228
          %s1230 = sshll.u32 %s13, 4
          %s1231 = int_to_ptr.hbm [resolvable:$true] %s1230
          %1236 = dma.vmem_to_hbm [thread:$0]  %s1229, 512, %s1231, [#allocation5], 128, 128, 8
        $region80: #{_gcn_lstm_run.1} parent=67 // pred_fallthru
          _
        // Predicated region
        $region81: #{_gcn_lstm_run.1} parent=67 // pred_check
          %p1237 = pneg %p342
        $region82: #{_gcn_lstm_run.1} parent=67 // pred_check_branch
          %1239 = sbr.rel (%p1237) target = $region84
        $region83: #{_gcn_lstm_run.1} parent=67 // pred_region
          %1241 = vsyncadd [#allocation5], 0
          %s1242 = sshll.u32 [#allocation6], 4
          %s1243 = int_to_ptr.vmem [resolvable:$true] %s1242
          %s1244 = sshll.u32 %s14, 4
          %s1245 = int_to_ptr.hbm [resolvable:$true] %s1244
          %1250 = dma.vmem_to_hbm [thread:$0]  %s1243, 512, %s1245, [#allocation5], 128, 128, 8
        $region84: #{_gcn_lstm_run.1} parent=67 // pred_fallthru
          _
        // Predicated region
        $region85: #{_gcn_lstm_run.1} parent=67 // pred_check
          %p1251 = pneg %p363
        $region86: #{_gcn_lstm_run.1} parent=67 // pred_check_branch
          %1253 = sbr.rel (%p1251) target = $region88
        $region87: #{_gcn_lstm_run.1} parent=67 // pred_region
          %1255 = vsyncadd [#allocation8], 0
          %s1256 = sshll.u32 [#allocation7], 4
          %s1257 = int_to_ptr.vmem [resolvable:$true] %s1256
          %s1258 = sshll.u32 %s15, 4
          %s1259 = int_to_ptr.hbm [resolvable:$true] %s1258
          %1264 = dma.vmem_to_hbm [thread:$0]  %s1257, 512, %s1259, [#allocation8], 128, 128, 8
        $region88: #{_gcn_lstm_run.1} parent=67 // pred_fallthru
          _
        // Predicated region
        $region89: #{_gcn_lstm_run.1} parent=67 // pred_check
          %p1265 = pneg %p300
        $region90: #{_gcn_lstm_run.1} parent=67 // pred_check_branch
          %1267 = sbr.rel (%p1265) target = $region92
        $region91: #{_gcn_lstm_run.1} parent=67 // pred_region
          %1269 = dma.done [#allocation3], 512
        $region92: #{_gcn_lstm_run.1} parent=67 // pred_fallthru
          _
        // Predicated region
        $region93: #{_gcn_lstm_run.1} parent=67 // pred_check
          %p1270 = pneg %p321
        $region94: #{_gcn_lstm_run.1} parent=67 // pred_check_branch
          %1272 = sbr.rel (%p1270) target = $region96
        $region95: #{_gcn_lstm_run.1} parent=67 // pred_region
          %1274 = dma.done [#allocation5], 512
        $region96: #{_gcn_lstm_run.1} parent=67 // pred_fallthru
          _
        // Predicated region
        $region97: #{_gcn_lstm_run.1} parent=67 // pred_check
          %p1275 = pneg %p342
        $region98: #{_gcn_lstm_run.1} parent=67 // pred_check_branch
          %1277 = sbr.rel (%p1275) target = $region100
        $region99: #{_gcn_lstm_run.1} parent=67 // pred_region
          %1279 = dma.done [#allocation5], 512
        $region100: #{_gcn_lstm_run.1} parent=67 // pred_fallthru
          _
        // Predicated region
        $region101: #{_gcn_lstm_run.1} parent=67 // pred_check
          %p1280 = pneg %p363
        $region102: #{_gcn_lstm_run.1} parent=67 // pred_check_branch
          %1282 = sbr.rel (%p1280) target = $region104
        $region103: #{_gcn_lstm_run.1} parent=67 // pred_region
          %1284 = dma.done [#allocation8], 512
        $region104: #{_gcn_lstm_run.1} parent=67 // pred_fallthru
          _
      $region68: #{_gcn_lstm_run.1} parent=5 // pred_fallthru
        _
      %p1285 = scmp.le.s32.totalorder 2, %s25
      // Predicated region
      $region105: #{_gcn_lstm_run.1} parent=5 // pred_check
        %p1286 = pneg %p1285
      $region106: #{_gcn_lstm_run.1} parent=5 // pred_check_branch
        %1288 = sbr.rel (%p1286) target = $region108
      $region107: #{_gcn_lstm_run.1} parent=5 // pred_region
        %s1289 = ssub.s32 %s25, 2
      $region108: #{_gcn_lstm_run.1} parent=5 // pred_fallthru
        _
    $region6: #{_gcn_lstm_run.1} parent=1 // loop_footer
      %s29 = sadd.s32 1, %s25
    $region7: #{_gcn_lstm_run.1} parent=1 // loop_footer_branch
      %24 = sbr.rel target = $region3
    $region8: #{_gcn_lstm_run.1} parent=1 // loop_exit
      _
    %1290 = vsyncpa [#allocation3], 1
    %s1291 = scalar_lea.sflag [#allocation3], 1
    %1292 = vsyncpa %s1291, 1
    %1293 = vsyncpa [#allocation5], 1
    %1294 = vsyncpa [#allocation8], 1

</llo_original>
